<compile_context>
chip_gen: v5e
topology: v5e:2x2
jax: 0.10.0
libtpu: 0.0.40
codegen_flags: <defaults>
</compile_context>

<pallas_src>
import functools

import jax
import jax.numpy as jnp
from jax.experimental import pallas as pl
from jax.experimental.pallas import tpu as pltpu


def _intermediate_kernel(x6_ref, wi_ref, bi_ref, wo_ref, bo_ref,
                         hi_ref, hs_ref,
                         gI_ref, bI_ref, gS_ref, bS_ref,
                         outI_ref, outS_ref,
                         acc_ref):
    # x6_ref : (1, tm, 6H) neighbor-concat activations in matmul dtype.
    # wi_ref : (6H, tk) k-slab of W_in; bi_ref: (1, tk) k-slab of b_in.
    # wo_ref : (tk, H) k-slab of W_out; bo_ref: (1, H).
    # hi/hs  : (1, tm, H) residual tiles.  outputs: (1, tm, H).
    # acc_ref: (tm, H) f32 scratch accumulator over the k axis.
    k = pl.program_id(2)
    nk = pl.num_programs(2)
    mdt = wi_ref.dtype

    @pl.when(k == 0)
    def _():
        acc_ref[...] = jnp.zeros_like(acc_ref)

    x = x6_ref[0]                                            # (tm, 6H), mdt
    # dense_in chunk: f32 MXU accumulation, bias + ReLU per k-chunk (valid:
    # both are elementwise over the INTER axis).
    h = jnp.dot(x, wi_ref[...], preferred_element_type=jnp.float32)
    h = jnp.maximum(h + bi_ref[...].astype(jnp.float32), 0.0)

    # dense_out chunk accumulated into the f32 scratch.
    acc_ref[...] += jnp.dot(h.astype(mdt), wo_ref[...],
                            preferred_element_type=jnp.float32)

    @pl.when(k == nk - 1)
    def _():
        y = acc_ref[...] + bo_ref[...].astype(jnp.float32)   # dropout = identity

        def layer_norm(v, gamma, beta):
            u = jnp.mean(v, axis=-1, keepdims=True)
            d = v - u
            s = jnp.mean(d * d, axis=-1, keepdims=True)
            return gamma * (d * jax.lax.rsqrt(s + 1e-12)) + beta

        res_I = y + hi_ref[0].astype(jnp.float32)
        res_S = y + hs_ref[0].astype(jnp.float32)
        outI_ref[0] = layer_norm(
            res_I, gI_ref[...].astype(jnp.float32),
            bI_ref[...].astype(jnp.float32)).astype(outI_ref.dtype)
        outS_ref[0] = layer_norm(
            res_S, gS_ref[...].astype(jnp.float32),
            bS_ref[...].astype(jnp.float32)).astype(outS_ref.dtype)


@functools.partial(jax.jit, static_argnames=("tm", "tk", "matmul_dtype"))
def intermediate_i_s_forward(hidden_I, hidden_S, params, *, tm=256, tk=512,
                             matmul_dtype=jnp.bfloat16):
    """hidden_I, hidden_S: (B, L, H) float32."""
    B, L, H = hidden_I.shape
    assert tm % 8 == 0
    n_tiles = pl.cdiv(L, tm)
    Lp = n_tiles * tm                                   # rows padded to tile multiple

    # Neighbor-shifted concat built once, directly in the matmul dtype.
    hin = jnp.concatenate([hidden_I, hidden_S], axis=2).astype(matmul_dtype)   # (B,L,2H)
    zrow = jnp.zeros((B, 1, 2 * H), matmul_dtype)
    h_left = jnp.concatenate([zrow, hin[:, :L - 1, :]], axis=1)
    h_right = jnp.concatenate([hin[:, 1:, :], zrow], axis=1)
    x6 = jnp.concatenate([hin, h_left, h_right], axis=2)                        # (B,L,6H)
    x6 = jnp.pad(x6, ((0, 0), (0, Lp - L), (0, 0)))                             # (B,Lp,6H)

    hi_p = jnp.pad(hidden_I, ((0, 0), (0, Lp - L), (0, 0)))                     # (B,Lp,H)
    hs_p = jnp.pad(hidden_S, ((0, 0), (0, Lp - L), (0, 0)))

    F6 = 6 * H
    INTER = params["w_in"].shape[1]
    n_k = pl.cdiv(INTER, tk)
    Ip = n_k * tk                                        # INTER padded to tk multiple

    # Zero-pad INTER: padded W_in cols / b_in entries give ReLU(0)=0, which
    # contributes nothing through the (also zero-padded) W_out rows.
    w_in = jnp.pad(params["w_in"], ((0, 0), (0, Ip - INTER))).astype(matmul_dtype)
    b_in = jnp.pad(params["b_in"], ((0, 0), (0, Ip - INTER)))
    w_out = jnp.pad(params["w_out"], ((0, Ip - INTER), (0, 0))).astype(matmul_dtype)
    b_out = params["b_out"]
    gI, bI = params["gamma_I"], params["beta_I"]
    gS, bS = params["gamma_S"], params["beta_S"]

    x_spec = pl.BlockSpec((1, tm, F6), lambda b, t, k: (b, t, 0))
    row_spec = lambda: pl.BlockSpec((1, tm, H), lambda b, t, k: (b, t, 0))
    vec_spec = lambda: pl.BlockSpec((1, H), lambda b, t, k: (0, 0))

    wbytes = jnp.dtype(matmul_dtype).itemsize
    cost = pl.CostEstimate(
        flops=2 * B * Lp * (F6 * Ip + Ip * H),
        transcendentals=2 * B * Lp,
        bytes_accessed=(x6.size * wbytes
                        + (hi_p.size + hs_p.size) * 4
                        + B * n_tiles * (F6 * Ip + Ip * H) * wbytes
                        + (Ip + 5 * H) * 4
                        + 2 * B * Lp * H * 4))

    outI, outS = pl.pallas_call(
        _intermediate_kernel,
        out_shape=(jax.ShapeDtypeStruct((B, Lp, H), hidden_I.dtype),
                   jax.ShapeDtypeStruct((B, Lp, H), hidden_S.dtype)),
        grid_spec=pltpu.PrefetchScalarGridSpec(
            num_scalar_prefetch=0,
            grid=(B, n_tiles, n_k),
            in_specs=[
                x_spec,                                            # x6 row tile
                pl.BlockSpec((F6, tk), lambda b, t, k: (0, k)),    # W_in k-slab
                pl.BlockSpec((1, tk), lambda b, t, k: (0, k)),     # b_in k-slab
                pl.BlockSpec((tk, H), lambda b, t, k: (k, 0)),     # W_out k-slab
                vec_spec(),                                        # b_out
                row_spec(),                                        # hidden_I residual
                row_spec(),                                        # hidden_S residual
                vec_spec(), vec_spec(),                            # gamma_I, beta_I
                vec_spec(), vec_spec(),                            # gamma_S, beta_S
            ],
            out_specs=[row_spec(), row_spec()],
            scratch_shapes=[pltpu.VMEM((tm, H), jnp.float32)],
        ),
        compiler_params=pltpu.CompilerParams(
            dimension_semantics=("parallel", "parallel", "arbitrary"),
            vmem_limit_bytes=48 * 1024 * 1024),
        cost_estimate=cost,
    )(x6, w_in, b_in, w_out, b_out, hi_p, hs_p, gI, bI, gS, bS)

    return outI[:, :L, :], outS[:, :L, :]


def init_params(key, hidden_size, intermediate_size):
    """Deterministic synthetic init matching nn.Linear / LayerNorm shapes."""
    k1, k2, k3, k4 = jax.random.split(key, 4)
    in_feat = hidden_size * 6
    lim_in = 1.0 / jnp.sqrt(in_feat)
    lim_out = 1.0 / jnp.sqrt(intermediate_size)
    return {
        # stored transposed (in_features, out_features) for x @ W
        "w_in": jax.random.uniform(k1, (in_feat, intermediate_size),
                                   jnp.float32, -lim_in, lim_in),
        "b_in": jax.random.uniform(k2, (1, intermediate_size),
                                   jnp.float32, -lim_in, lim_in),
        "w_out": jax.random.uniform(k3, (intermediate_size, hidden_size),
                                    jnp.float32, -lim_out, lim_out),
        "b_out": jax.random.uniform(k4, (1, hidden_size),
                                    jnp.float32, -lim_out, lim_out),
        "gamma_I": jnp.ones((1, hidden_size), jnp.float32),
        "beta_I": jnp.zeros((1, hidden_size), jnp.float32),
        "gamma_S": jnp.ones((1, hidden_size), jnp.float32),
        "beta_S": jnp.zeros((1, hidden_size), jnp.float32),
    }


def _reference(hidden_I, hidden_S, params, matmul_dtype=jnp.float32):
    """Pure-JAX reference of the PyTorch forward (dropout = identity)."""
    B, L, H = hidden_I.shape
    hin = jnp.concatenate([hidden_I, hidden_S], axis=2)
    pad = jnp.zeros((B, 1, 2 * H), hin.dtype)
    h_left = jnp.concatenate([pad, hin[:, :L - 1, :]], axis=1)
    h_right = jnp.concatenate([hin[:, 1:, :], pad], axis=1)
    x = jnp.concatenate([hin, h_left, h_right], axis=2)            # (B, L, 6H)
    w_in = params["w_in"].astype(matmul_dtype)
    w_out = params["w_out"].astype(matmul_dtype)
    h = jnp.dot(x.astype(matmul_dtype), w_in,
                preferred_element_type=jnp.float32) + params["b_in"][0]
    h = jnp.maximum(h, 0.0)
    y = jnp.dot(h.astype(matmul_dtype), w_out,
                preferred_element_type=jnp.float32) + params["b_out"][0]

    def ln(v, g, b):
        u = v.mean(-1, keepdims=True)
        s = ((v - u) ** 2).mean(-1, keepdims=True)
        return g[0] * ((v - u) / jnp.sqrt(s + 1e-12)) + b[0]

    return (ln(y + hidden_I, params["gamma_I"], params["beta_I"]),
            ln(y + hidden_S, params["gamma_S"], params["beta_S"]))


if __name__ == "__main__":
    B, L, H, INTER = 2, 8, 32, 64
    key = jax.random.PRNGKey(0)
    kI, kS, kp = jax.random.split(key, 3)
    hidden_I = jax.random.normal(kI, (B, L, H), jnp.float32)
    hidden_S = jax.random.normal(kS, (B, L, H), jnp.float32)
    params = init_params(kp, H, INTER)

    # Exact module semantics (all-f32 matmuls).
    outI, outS = intermediate_i_s_forward(hidden_I, hidden_S, params,
                                          tm=128, tk=128,
                                          matmul_dtype=jnp.float32)
    jax.block_until_ready((outI, outS))
    refI, refS = _reference(hidden_I, hidden_S, params, jnp.float32)
    assert jnp.allclose(outI, refI, atol=1e-4, rtol=1e-4)
    assert jnp.allclose(outS, refS, atol=1e-4, rtol=1e-4)

    # Performance path: bf16 activations / weights, f32 accumulation & LayerNorm.
    outIb, outSb = intermediate_i_s_forward(hidden_I, hidden_S, params,
                                            tm=128, tk=128,
                                            matmul_dtype=jnp.bfloat16)
    jax.block_until_ready((outIb, outSb))
    refIb, refSb = _reference(hidden_I, hidden_S, params, jnp.bfloat16)
    assert jnp.allclose(outIb, refIb, atol=2e-3, rtol=2e-3)
    assert jnp.allclose(outSb, refSb, atol=2e-3, rtol=2e-3)

    print("KERNEL_OK")
</pallas_src>

<mosaic_0001>
module attributes {stable_mosaic.version = 11 : i64} {
  func.func @_intermediate_kernel(%arg0: i32, %arg1: i32, %arg2: i32, %arg3: memref<1x128x192xf32, #tpu.memory_space<vmem>>, %arg4: memref<192x128xf32, #tpu.memory_space<vmem>>, %arg5: memref<1x128xf32, #tpu.memory_space<vmem>>, %arg6: memref<128x32xf32, #tpu.memory_space<vmem>>, %arg7: memref<1x32xf32, #tpu.memory_space<vmem>>, %arg8: memref<1x128x32xf32, #tpu.memory_space<vmem>>, %arg9: memref<1x128x32xf32, #tpu.memory_space<vmem>>, %arg10: memref<1x32xf32, #tpu.memory_space<vmem>>, %arg11: memref<1x32xf32, #tpu.memory_space<vmem>>, %arg12: memref<1x32xf32, #tpu.memory_space<vmem>>, %arg13: memref<1x32xf32, #tpu.memory_space<vmem>>, %arg14: memref<1x128x32xf32, #tpu.memory_space<vmem>>, %arg15: memref<1x128x32xf32, #tpu.memory_space<vmem>>, %arg16: memref<128x32xf32, #tpu.memory_space<vmem>>) attributes {dimension_semantics = [#tpu.dimension_semantics<parallel>, #tpu.dimension_semantics<parallel>, #tpu.dimension_semantics<arbitrary>], iteration_bounds = array<i64: 2, 1, 1>, scalar_prefetch = 0 : i64, scratch_operands = 1 : i64, tpu.core_type = #tpu.core_type<tc>, window_params = [{transform_indices = @transform_0, window_bounds = array<i64: 1, 128, 192>}, {transform_indices = @transform_1, window_bounds = array<i64: 192, 128>}, {transform_indices = @transform_2, window_bounds = array<i64: 1, 128>}, {transform_indices = @transform_3, window_bounds = array<i64: 128, 32>}, {pipeline_mode = #tpu.pipeline_mode<synchronous>, transform_indices = @transform_4, window_bounds = array<i64: 1, 32>}, {transform_indices = @transform_5, window_bounds = array<i64: 1, 128, 32>}, {transform_indices = @transform_6, window_bounds = array<i64: 1, 128, 32>}, {pipeline_mode = #tpu.pipeline_mode<synchronous>, transform_indices = @transform_7, window_bounds = array<i64: 1, 32>}, {pipeline_mode = #tpu.pipeline_mode<synchronous>, transform_indices = @transform_8, window_bounds = array<i64: 1, 32>}, {pipeline_mode = #tpu.pipeline_mode<synchronous>, transform_indices = @transform_9, window_bounds = array<i64: 1, 32>}, {pipeline_mode = #tpu.pipeline_mode<synchronous>, transform_indices = @transform_10, window_bounds = array<i64: 1, 32>}, {transform_indices = @transform_11, window_bounds = array<i64: 1, 128, 32>}, {transform_indices = @transform_12, window_bounds = array<i64: 1, 128, 32>}]} {
    %c0_i32 = arith.constant 0 : i32
    %0 = arith.cmpi eq, %arg2, %c0_i32 : i32
    %1 = arith.extui %0 : i1 to i32
    %c0_i32_0 = arith.constant 0 : i32
    %2 = arith.cmpi ne, %1, %c0_i32_0 : i32
    scf.if %2 {
      %cst_17 = arith.constant 0.000000e+00 : f32
      %20 = vector.broadcast %cst_17 : f32 to vector<128x32xf32>
      %c0_18 = arith.constant 0 : index
      %c0_19 = arith.constant 0 : index
      %21 = vector.load %arg16[%c0_18, %c0_19] : memref<128x32xf32, #tpu.memory_space<vmem>>, vector<128x32xf32>
      tpu.vector_store %arg16[%c0_18, %c0_19], %20 {strides = array<i32>} : memref<128x32xf32, #tpu.memory_space<vmem>>, vector<128x32xf32>,
    } else {
    }
    %c0 = arith.constant 0 : index
    %c0_1 = arith.constant 0 : index
    %c0_2 = arith.constant 0 : index
    %3 = vector.load %arg3[%c0, %c0_1, %c0_2] : memref<1x128x192xf32, #tpu.memory_space<vmem>>, vector<1x128x192xf32>
    %4 = vector.shape_cast %3 : vector<1x128x192xf32> to vector<128x192xf32>
    %c0_3 = arith.constant 0 : index
    %c0_4 = arith.constant 0 : index
    %5 = vector.load %arg4[%c0_3, %c0_4] : memref<192x128xf32, #tpu.memory_space<vmem>>, vector<192x128xf32>
    %cst = arith.constant dense<0.000000e+00> : vector<128x128xf32>
    %6 = tpu.matmul %4, %5, %cst {dimension_numbers = #tpu.dot_dimension_numbers<[1], [0], [0], [1], [0, 0, 1, 1], [], []>} : vector<128x192xf32>, vector<192x128xf32>, vector<128x128xf32> -> vector<128x128xf32>
    %c0_5 = arith.constant 0 : index
    %c0_6 = arith.constant 0 : index
    %7 = vector.load %arg5[%c0_5, %c0_6] : memref<1x128xf32, #tpu.memory_space<vmem>>, vector<1x128xf32>
    %8 = vector.broadcast %7 : vector<1x128xf32> to vector<128x128xf32>
    %9 = arith.addf %6, %8 : vector<128x128xf32>
    %cst_7 = arith.constant 0.000000e+00 : f32
    %10 = vector.broadcast %cst_7 : f32 to vector<128x128xf32>
    %11 = arith.maximumf %9, %10 : vector<128x128xf32>
    %c0_8 = arith.constant 0 : index
    %c0_9 = arith.constant 0 : index
    %12 = vector.load %arg16[%c0_8, %c0_9] : memref<128x32xf32, #tpu.memory_space<vmem>>, vector<128x32xf32>
    %c0_10 = arith.constant 0 : index
    %c0_11 = arith.constant 0 : index
    %13 = vector.load %arg6[%c0_10, %c0_11] : memref<128x32xf32, #tpu.memory_space<vmem>>, vector<128x32xf32>
    %cst_12 = arith.constant dense<0.000000e+00> : vector<128x32xf32>
    %14 = tpu.matmul %11, %13, %cst_12 {dimension_numbers = #tpu.dot_dimension_numbers<[1], [0], [0], [1], [0, 0, 1, 1], [], []>} : vector<128x128xf32>, vector<128x32xf32>, vector<128x32xf32> -> vector<128x32xf32>
    %15 = arith.addf %12, %14 : vector<128x32xf32>
    %c0_13 = arith.constant 0 : index
    %c0_14 = arith.constant 0 : index
    %16 = vector.load %arg16[%c0_13, %c0_14] : memref<128x32xf32, #tpu.memory_space<vmem>>, vector<128x32xf32>
    tpu.vector_store %arg16[%c0_13, %c0_14], %15 {strides = array<i32>} : memref<128x32xf32, #tpu.memory_space<vmem>>, vector<128x32xf32>,
    %c0_i32_15 = arith.constant 0 : i32
    %17 = arith.cmpi eq, %arg2, %c0_i32_15 : i32
    %18 = arith.extui %17 : i1 to i32
    %c0_i32_16 = arith.constant 0 : i32
    %19 = arith.cmpi ne, %18, %c0_i32_16 : i32
    scf.if %19 {
      %c0_17 = arith.constant 0 : index
      %c0_18 = arith.constant 0 : index
      %20 = vector.load %arg16[%c0_17, %c0_18] : memref<128x32xf32, #tpu.memory_space<vmem>>, vector<128x32xf32>
      %c0_19 = arith.constant 0 : index
      %c0_20 = arith.constant 0 : index
      %21 = vector.load %arg7[%c0_19, %c0_20] : memref<1x32xf32, #tpu.memory_space<vmem>>, vector<1x32xf32>
      %22 = vector.broadcast %21 : vector<1x32xf32> to vector<128x32xf32>
      %23 = arith.addf %20, %22 : vector<128x32xf32>
      %c0_21 = arith.constant 0 : index
      %c0_22 = arith.constant 0 : index
      %c0_23 = arith.constant 0 : index
      %24 = vector.load %arg8[%c0_21, %c0_22, %c0_23] : memref<1x128x32xf32, #tpu.memory_space<vmem>>, vector<1x128x32xf32>
      %25 = vector.shape_cast %24 : vector<1x128x32xf32> to vector<128x32xf32>
      %26 = arith.addf %23, %25 : vector<128x32xf32>
      %c0_24 = arith.constant 0 : index
      %c0_25 = arith.constant 0 : index
      %c0_26 = arith.constant 0 : index
      %27 = vector.load %arg9[%c0_24, %c0_25, %c0_26] : memref<1x128x32xf32, #tpu.memory_space<vmem>>, vector<1x128x32xf32>
      %28 = vector.shape_cast %27 : vector<1x128x32xf32> to vector<128x32xf32>
      %29 = arith.addf %23, %28 : vector<128x32xf32>
      %c0_27 = arith.constant 0 : index
      %c0_28 = arith.constant 0 : index
      %30 = vector.load %arg10[%c0_27, %c0_28] : memref<1x32xf32, #tpu.memory_space<vmem>>, vector<1x32xf32>
      %c0_29 = arith.constant 0 : index
      %c0_30 = arith.constant 0 : index
      %31 = vector.load %arg11[%c0_29, %c0_30] : memref<1x32xf32, #tpu.memory_space<vmem>>, vector<1x32xf32>
      %cst_31 = arith.constant dense<0.000000e+00> : vector<128xf32>
      %32 = vector.multi_reduction <add>, %26, %cst_31 [1] : vector<128x32xf32> to vector<128xf32>
      %33 = vector.shape_cast %32 : vector<128xf32> to vector<128x1xf32>
      %cst_32 = arith.constant 3.200000e+01 : f32
      %34 = vector.broadcast %cst_32 : f32 to vector<128x1xf32>
      %35 = arith.divf %33, %34 : vector<128x1xf32>
      %36 = vector.broadcast %35 : vector<128x1xf32> to vector<128x32xf32>
      %37 = arith.subf %26, %36 : vector<128x32xf32>
      %38 = arith.mulf %37, %37 : vector<128x32xf32>
      %cst_33 = arith.constant dense<0.000000e+00> : vector<128xf32>
      %39 = vector.multi_reduction <add>, %38, %cst_33 [1] : vector<128x32xf32> to vector<128xf32>
      %40 = vector.shape_cast %39 : vector<128xf32> to vector<128x1xf32>
      %cst_34 = arith.constant 3.200000e+01 : f32
      %41 = vector.broadcast %cst_34 : f32 to vector<128x1xf32>
      %42 = arith.divf %40, %41 : vector<128x1xf32>
      %cst_35 = arith.constant 9.99999996E-13 : f32
      %43 = vector.broadcast %cst_35 : f32 to vector<128x1xf32>
      %44 = arith.addf %42, %43 : vector<128x1xf32>
      %45 = math.rsqrt %44 : vector<128x1xf32>
      %46 = vector.broadcast %45 : vector<128x1xf32> to vector<128x32xf32>
      %47 = arith.mulf %37, %46 : vector<128x32xf32>
      %48 = vector.broadcast %30 : vector<1x32xf32> to vector<128x32xf32>
      %49 = arith.mulf %48, %47 : vector<128x32xf32>
      %50 = vector.broadcast %31 : vector<1x32xf32> to vector<128x32xf32>
      %51 = arith.addf %49, %50 : vector<128x32xf32>
      %c0_36 = arith.constant 0 : index
      %c0_37 = arith.constant 0 : index
      %c0_38 = arith.constant 0 : index
      %52 = vector.load %arg14[%c0_36, %c0_37, %c0_38] : memref<1x128x32xf32, #tpu.memory_space<vmem>>, vector<1x128x32xf32>
      %53 = vector.shape_cast %52 : vector<1x128x32xf32> to vector<128x32xf32>
      %54 = vector.shape_cast %51 : vector<128x32xf32> to vector<1x128x32xf32>
      tpu.vector_store %arg14[%c0_36, %c0_37, %c0_38], %54 {strides = array<i32>} : memref<1x128x32xf32, #tpu.memory_space<vmem>>, vector<1x128x32xf32>,
      %c0_39 = arith.constant 0 : index
      %c0_40 = arith.constant 0 : index
      %55 = vector.load %arg12[%c0_39, %c0_40] : memref<1x32xf32, #tpu.memory_space<vmem>>, vector<1x32xf32>
      %c0_41 = arith.constant 0 : index
      %c0_42 = arith.constant 0 : index
      %56 = vector.load %arg13[%c0_41, %c0_42] : memref<1x32xf32, #tpu.memory_space<vmem>>, vector<1x32xf32>
      %cst_43 = arith.constant dense<0.000000e+00> : vector<128xf32>
      %57 = vector.multi_reduction <add>, %29, %cst_43 [1] : vector<128x32xf32> to vector<128xf32>
      %58 = vector.shape_cast %57 : vector<128xf32> to vector<128x1xf32>
      %cst_44 = arith.constant 3.200000e+01 : f32
      %59 = vector.broadcast %cst_44 : f32 to vector<128x1xf32>
      %60 = arith.divf %58, %59 : vector<128x1xf32>
      %61 = vector.broadcast %60 : vector<128x1xf32> to vector<128x32xf32>
      %62 = arith.subf %29, %61 : vector<128x32xf32>
      %63 = arith.mulf %62, %62 : vector<128x32xf32>
      %cst_45 = arith.constant dense<0.000000e+00> : vector<128xf32>
      %64 = vector.multi_reduction <add>, %63, %cst_45 [1] : vector<128x32xf32> to vector<128xf32>
      %65 = vector.shape_cast %64 : vector<128xf32> to vector<128x1xf32>
      %cst_46 = arith.constant 3.200000e+01 : f32
      %66 = vector.broadcast %cst_46 : f32 to vector<128x1xf32>
      %67 = arith.divf %65, %66 : vector<128x1xf32>
      %cst_47 = arith.constant 9.99999996E-13 : f32
      %68 = vector.broadcast %cst_47 : f32 to vector<128x1xf32>
      %69 = arith.addf %67, %68 : vector<128x1xf32>
      %70 = math.rsqrt %69 : vector<128x1xf32>
      %71 = vector.broadcast %70 : vector<128x1xf32> to vector<128x32xf32>
      %72 = arith.mulf %62, %71 : vector<128x32xf32>
      %73 = vector.broadcast %55 : vector<1x32xf32> to vector<128x32xf32>
      %74 = arith.mulf %73, %72 : vector<128x32xf32>
      %75 = vector.broadcast %56 : vector<1x32xf32> to vector<128x32xf32>
      %76 = arith.addf %74, %75 : vector<128x32xf32>
      %c0_48 = arith.constant 0 : index
      %c0_49 = arith.constant 0 : index
      %c0_50 = arith.constant 0 : index
      %77 = vector.load %arg15[%c0_48, %c0_49, %c0_50] : memref<1x128x32xf32, #tpu.memory_space<vmem>>, vector<1x128x32xf32>
      %78 = vector.shape_cast %77 : vector<1x128x32xf32> to vector<128x32xf32>
      %79 = vector.shape_cast %76 : vector<128x32xf32> to vector<1x128x32xf32>
      tpu.vector_store %arg15[%c0_48, %c0_49, %c0_50], %79 {strides = array<i32>} : memref<1x128x32xf32, #tpu.memory_space<vmem>>, vector<1x128x32xf32>,
    } else {
    }
    return
  }
  func.func @transform_0(%arg0: i32, %arg1: i32, %arg2: i32) -> (i32, i32, i32) {
    %c0_i32 = arith.constant 0 : i32
    %c0_i32_0 = arith.constant 0 : i32
    return %arg0, %arg1, %c0_i32 : i32, i32, i32
  }
  func.func @transform_1(%arg0: i32, %arg1: i32, %arg2: i32) -> (i32, i32) {
    %c0_i32 = arith.constant 0 : i32
    %c0_i32_0 = arith.constant 0 : i32
    return %c0_i32, %arg2 : i32, i32
  }
  func.func @transform_2(%arg0: i32, %arg1: i32, %arg2: i32) -> (i32, i32) {
    %c0_i32 = arith.constant 0 : i32
    %c0_i32_0 = arith.constant 0 : i32
    return %c0_i32, %arg2 : i32, i32
  }
  func.func @transform_3(%arg0: i32, %arg1: i32, %arg2: i32) -> (i32, i32) {
    %c0_i32 = arith.constant 0 : i32
    %c0_i32_0 = arith.constant 0 : i32
    return %arg2, %c0_i32 : i32, i32
  }
  func.func @transform_4(%arg0: i32, %arg1: i32, %arg2: i32) -> (i32, i32) {
    %c0_i32 = arith.constant 0 : i32
    %c0_i32_0 = arith.constant 0 : i32
    %c0_i32_1 = arith.constant 0 : i32
    return %c0_i32, %c0_i32_0 : i32, i32
  }
  func.func @transform_5(%arg0: i32, %arg1: i32, %arg2: i32) -> (i32, i32, i32) {
    %c0_i32 = arith.constant 0 : i32
    %c0_i32_0 = arith.constant 0 : i32
    return %arg0, %arg1, %c0_i32 : i32, i32, i32
  }
  func.func @transform_6(%arg0: i32, %arg1: i32, %arg2: i32) -> (i32, i32, i32) {
    %c0_i32 = arith.constant 0 : i32
    %c0_i32_0 = arith.constant 0 : i32
    return %arg0, %arg1, %c0_i32 : i32, i32, i32
  }
  func.func @transform_7(%arg0: i32, %arg1: i32, %arg2: i32) -> (i32, i32) {
    %c0_i32 = arith.constant 0 : i32
    %c0_i32_0 = arith.constant 0 : i32
    %c0_i32_1 = arith.constant 0 : i32
    return %c0_i32, %c0_i32_0 : i32, i32
  }
  func.func @transform_8(%arg0: i32, %arg1: i32, %arg2: i32) -> (i32, i32) {
    %c0_i32 = arith.constant 0 : i32
    %c0_i32_0 = arith.constant 0 : i32
    %c0_i32_1 = arith.constant 0 : i32
    return %c0_i32, %c0_i32_0 : i32, i32
  }
  func.func @transform_9(%arg0: i32, %arg1: i32, %arg2: i32) -> (i32, i32) {
    %c0_i32 = arith.constant 0 : i32
    %c0_i32_0 = arith.constant 0 : i32
    %c0_i32_1 = arith.constant 0 : i32
    return %c0_i32, %c0_i32_0 : i32, i32
  }
  func.func @transform_10(%arg0: i32, %arg1: i32, %arg2: i32) -> (i32, i32) {
    %c0_i32 = arith.constant 0 : i32
    %c0_i32_0 = arith.constant 0 : i32
    %c0_i32_1 = arith.constant 0 : i32
    return %c0_i32, %c0_i32_0 : i32, i32
  }
  func.func @transform_11(%arg0: i32, %arg1: i32, %arg2: i32) -> (i32, i32, i32) {
    %c0_i32 = arith.constant 0 : i32
    %c0_i32_0 = arith.constant 0 : i32
    return %arg0, %arg1, %c0_i32 : i32, i32, i32
  }
  func.func @transform_12(%arg0: i32, %arg1: i32, %arg2: i32) -> (i32, i32, i32) {
    %c0_i32 = arith.constant 0 : i32
    %c0_i32_0 = arith.constant 0 : i32
    return %arg0, %arg1, %c0_i32 : i32, i32, i32
  }
}

</mosaic_0001>

<llo_original>
// kernel: intermediate_i_s_forward.1
$region0: #{intermediate_i_s_forward.1}
  #allocation0 [shape = 'u32[]', space=smem, size = 0x4, offset = 0x4, fixed_abs, tag = 'smem constant byte address 0x4 - core index']
  #allocation1 [shape = 'u32[72,128]{1,0:T(1,128)}', space=vmem, size = 0x9000, scoped, tag = 'internal scratch']
  #allocation2 [shape = 'f32[128,32]{1,0:T(8,128)}', space=vmem, size = 0x10000, scoped, tag = 'scratch operand']
  %s0 = inlined_call_operand.vmem [shape: f32[2,128,192], index: 0, kind: input, shape index: {}]
  %s1 = inlined_call_operand.vmem [shape: f32[192,128], index: 1, kind: input, shape index: {}]
  %s2 = inlined_call_operand.vmem [shape: f32[1,128], index: 2, kind: input, shape index: {}]
  %s3 = inlined_call_operand.vmem [shape: f32[128,32], index: 3, kind: input, shape index: {}]
  %s4 = inlined_call_operand.vmem [shape: f32[1,32], index: 4, kind: input, shape index: {}]
  %s5 = inlined_call_operand.vmem [shape: f32[2,128,32], index: 5, kind: input, shape index: {}]
  %s6 = inlined_call_operand.vmem [shape: f32[2,128,32], index: 6, kind: input, shape index: {}]
  %s7 = inlined_call_operand.vmem [shape: f32[1,32], index: 7, kind: input, shape index: {}]
  %s8 = inlined_call_operand.vmem [shape: f32[1,32], index: 8, kind: input, shape index: {}]
  %s9 = inlined_call_operand.vmem [shape: f32[1,32], index: 9, kind: input, shape index: {}]
  %s10 = inlined_call_operand.vmem [shape: f32[1,32], index: 10, kind: input, shape index: {}]
  %s11 = inlined_call_operand.vmem [shape: f32[2,128,32], index: 11, kind: output, shape index: {0}]
  %s12 = inlined_call_operand.vmem [shape: f32[2,128,32], index: 12, kind: output, shape index: {1}]
  %13 = xla_tuple %s11, %s12
  %s14 = sld [smem:[#allocation0]]
  $region93: #{intermediate_i_s_forward.1} parent=0
    _
  %s16 = ssub.s32 1, %s14
  %s17 = scalar_select 0, %s16, %s14
  loop: start=0, step=1, limit=4
  $region2: #{intermediate_i_s_forward.1} parent=0 // loop_pre_header
    _
  $region3: #{intermediate_i_s_forward.1} parent=0 // loop_header
    %s19 = sphi 0, %s23
    %p20 = scmp.ge.s32.totalorder %s19, 4
    %s26 = sphi 0, %s45
    %s27 = sphi 0, %s41
    %s28 = sphi 0, %s37
    %s29 = sphi 0, %s26
    %s30 = sphi 0, %s27
    %s31 = sphi 0, %s28
    %s32 = sphi 0, %s29
    %s33 = sphi 0, %s30
    %s34 = sphi 0, %s31
    %s50 = sphi 0, %s52
    %s53 = sphi 0, %s50
    %s54 = sphi 0, %s53
    %s70 = sphi 0, %s54
    %s76 = sphi 0, %s78
    %s79 = sphi 0, %s76
    %s80 = sphi 0, %s79
    %s96 = sphi 0, %s80
    %s102 = sphi 0, %s104
    %s105 = sphi 0, %s102
    %s106 = sphi 0, %s105
    %s122 = sphi 0, %s106
    %s128 = sphi 0, %s130
    %s131 = sphi 0, %s128
    %s132 = sphi 0, %s131
    %s148 = sphi 0, %s132
    %s152 = sphi 0, %s152
    %s154 = sphi 0, %s152
    %s155 = sphi 0, %s154
    %s169 = sphi 0, %s155
    %s177 = sphi 0, %s179
    %s180 = sphi 0, %s177
    %s181 = sphi 0, %s180
    %s197 = sphi 0, %s181
    %s205 = sphi 0, %s207
    %s208 = sphi 0, %s205
    %s209 = sphi 0, %s208
    %s225 = sphi 0, %s209
    %s229 = sphi 0, %s229
    %s231 = sphi 0, %s229
    %s232 = sphi 0, %s231
    %s246 = sphi 0, %s232
    %s250 = sphi 0, %s250
    %s252 = sphi 0, %s250
    %s253 = sphi 0, %s252
    %s267 = sphi 0, %s253
    %s271 = sphi 0, %s271
    %s273 = sphi 0, %s271
    %s274 = sphi 0, %s273
    %s288 = sphi 0, %s274
    %s292 = sphi 0, %s292
    %s294 = sphi 0, %s292
    %s295 = sphi 0, %s294
    %s309 = sphi 0, %s295
    %s317 = sphi 0, %s319
    %s320 = sphi 0, %s317
    %s321 = sphi 0, %s320
    %s337 = sphi 0, %s321
    %s345 = sphi 0, %s347
    %s348 = sphi 0, %s345
    %s349 = sphi 0, %s348
    %s365 = sphi 0, %s349
  $region4: #{intermediate_i_s_forward.1} parent=0 // loop_header_branch
    %22 = sbr.rel (%p20) target = $region8
  $region5: #{intermediate_i_s_forward.1} parent=0 // loop_body
    %s24 = ssub.s32 %s19, 1
    %s25 = ssub.s32 %s19, 2
    %s35 = sadd.s32 1, %s28
    %p36 = scmp.ge.s32.totalorder %s35, 1
    %s37 = scalar_select %p36, 0, %s35
    %s38 = sadd.s32 1, %s27
    %s39 = scalar_select %p36, %s38, %s27
    %p40 = scmp.ge.s32.totalorder %s39, 1
    %s41 = scalar_select %p40, 0, %s39
    %s42 = sadd.s32 1, %s26
    %s43 = scalar_select %p40, %s42, %s26
    %p44 = scmp.ge.s32.totalorder %s43, 2
    %s45 = scalar_select %p44, 0, %s43
    %s46 = ssub.s32 %s26, %s45
    %s47 = ssub.s32 %s27, %s41
    %s48 = sor.u32 %s46, %s47
    %p49 = scmp.eq.s32.totalorder %s48, 0
    %s51 = sadd.s32 %s50, 1
    %s52 = scalar_select %p49, %s50, %s51
    %p55 = pneg %p49
    %p56 = scmp.eq.s32.totalorder %s19, 1
    %p57 = por %p55, %p56
    %p58 = scmp.ne.s32.totalorder %s50, %s53
    %p59 = scmp.eq.s32.totalorder %s19, 0
    %p60 = por %p58, %p59
    %p61 = scmp.ne.s32.totalorder %s50, %s53
    %p62 = scmp.eq.s32.totalorder %s24, 1
    %p63 = por %p61, %p62
    %p64 = scmp.ne.s32.totalorder %s53, %s54
    %p65 = scmp.eq.s32.totalorder %s24, 0
    %p66 = por %p64, %p65
    %p67 = scmp.ne.s32.totalorder %s53, %s54
    %p68 = scmp.eq.s32.totalorder %s25, 1
    %p69 = por %p67, %p68
    %p71 = scmp.ne.s32.totalorder %s54, %s70
    %p72 = scmp.eq.s32.totalorder %s25, 0
    %p73 = por %p71, %p72
    %s74 = ssub.s32 %s28, %s37
    %p75 = scmp.eq.s32.totalorder %s74, 0
    %s77 = sadd.s32 %s76, 1
    %s78 = scalar_select %p75, %s76, %s77
    %p81 = pneg %p75
    %p82 = scmp.eq.s32.totalorder %s19, 1
    %p83 = por %p81, %p82
    %p84 = scmp.ne.s32.totalorder %s76, %s79
    %p85 = scmp.eq.s32.totalorder %s19, 0
    %p86 = por %p84, %p85
    %p87 = scmp.ne.s32.totalorder %s76, %s79
    %p88 = scmp.eq.s32.totalorder %s24, 1
    %p89 = por %p87, %p88
    %p90 = scmp.ne.s32.totalorder %s79, %s80
    %p91 = scmp.eq.s32.totalorder %s24, 0
    %p92 = por %p90, %p91
    %p93 = scmp.ne.s32.totalorder %s79, %s80
    %p94 = scmp.eq.s32.totalorder %s25, 1
    %p95 = por %p93, %p94
    %p97 = scmp.ne.s32.totalorder %s80, %s96
    %p98 = scmp.eq.s32.totalorder %s25, 0
    %p99 = por %p97, %p98
    %s100 = ssub.s32 %s28, %s37
    %p101 = scmp.eq.s32.totalorder %s100, 0
    %s103 = sadd.s32 %s102, 1
    %s104 = scalar_select %p101, %s102, %s103
    %p107 = pneg %p101
    %p108 = scmp.eq.s32.totalorder %s19, 1
    %p109 = por %p107, %p108
    %p110 = scmp.ne.s32.totalorder %s102, %s105
    %p111 = scmp.eq.s32.totalorder %s19, 0
    %p112 = por %p110, %p111
    %p113 = scmp.ne.s32.totalorder %s102, %s105
    %p114 = scmp.eq.s32.totalorder %s24, 1
    %p115 = por %p113, %p114
    %p116 = scmp.ne.s32.totalorder %s105, %s106
    %p117 = scmp.eq.s32.totalorder %s24, 0
    %p118 = por %p116, %p117
    %p119 = scmp.ne.s32.totalorder %s105, %s106
    %p120 = scmp.eq.s32.totalorder %s25, 1
    %p121 = por %p119, %p120
    %p123 = scmp.ne.s32.totalorder %s106, %s122
    %p124 = scmp.eq.s32.totalorder %s25, 0
    %p125 = por %p123, %p124
    %s126 = ssub.s32 %s28, %s37
    %p127 = scmp.eq.s32.totalorder %s126, 0
    %s129 = sadd.s32 %s128, 1
    %s130 = scalar_select %p127, %s128, %s129
    %p133 = pneg %p127
    %p134 = scmp.eq.s32.totalorder %s19, 1
    %p135 = por %p133, %p134
    %p136 = scmp.ne.s32.totalorder %s128, %s131
    %p137 = scmp.eq.s32.totalorder %s19, 0
    %p138 = por %p136, %p137
    %p139 = scmp.ne.s32.totalorder %s128, %s131
    %p140 = scmp.eq.s32.totalorder %s24, 1
    %p141 = por %p139, %p140
    %p142 = scmp.ne.s32.totalorder %s131, %s132
    %p143 = scmp.eq.s32.totalorder %s24, 0
    %p144 = por %p142, %p143
    %p145 = scmp.ne.s32.totalorder %s131, %s132
    %p146 = scmp.eq.s32.totalorder %s25, 1
    %p147 = por %p145, %p146
    %p149 = scmp.ne.s32.totalorder %s132, %s148
    %p150 = scmp.eq.s32.totalorder %s25, 0
    %p151 = por %p149, %p150
    %s153 = sadd.s32 %s152, 1
    %p156 = scmp.eq.s32.totalorder %s19, 1
    %p157 = scmp.ne.s32.totalorder %s152, %s154
    %p158 = scmp.eq.s32.totalorder %s19, 0
    %p159 = por %p157, %p158
    %p160 = scmp.ne.s32.totalorder %s152, %s154
    %p161 = scmp.eq.s32.totalorder %s24, 1
    %p162 = por %p160, %p161
    %p163 = scmp.ne.s32.totalorder %s154, %s155
    %p164 = scmp.eq.s32.totalorder %s24, 0
    %p165 = por %p163, %p164
    %p166 = scmp.ne.s32.totalorder %s154, %s155
    %p167 = scmp.eq.s32.totalorder %s25, 1
    %p168 = por %p166, %p167
    %p170 = scmp.ne.s32.totalorder %s155, %s169
    %p171 = scmp.eq.s32.totalorder %s25, 0
    %p172 = por %p170, %p171
    %s173 = ssub.s32 %s26, %s45
    %s174 = ssub.s32 %s27, %s41
    %s175 = sor.u32 %s173, %s174
    %p176 = scmp.eq.s32.totalorder %s175, 0
    %s178 = sadd.s32 %s177, 1
    %s179 = scalar_select %p176, %s177, %s178
    %p182 = pneg %p176
    %p183 = scmp.eq.s32.totalorder %s19, 1
    %p184 = por %p182, %p183
    %p185 = scmp.ne.s32.totalorder %s177, %s180
    %p186 = scmp.eq.s32.totalorder %s19, 0
    %p187 = por %p185, %p186
    %p188 = scmp.ne.s32.totalorder %s177, %s180
    %p189 = scmp.eq.s32.totalorder %s24, 1
    %p190 = por %p188, %p189
    %p191 = scmp.ne.s32.totalorder %s180, %s181
    %p192 = scmp.eq.s32.totalorder %s24, 0
    %p193 = por %p191, %p192
    %p194 = scmp.ne.s32.totalorder %s180, %s181
    %p195 = scmp.eq.s32.totalorder %s25, 1
    %p196 = por %p194, %p195
    %p198 = scmp.ne.s32.totalorder %s181, %s197
    %p199 = scmp.eq.s32.totalorder %s25, 0
    %p200 = por %p198, %p199
    %s201 = ssub.s32 %s26, %s45
    %s202 = ssub.s32 %s27, %s41
    %s203 = sor.u32 %s201, %s202
    %p204 = scmp.eq.s32.totalorder %s203, 0
    %s206 = sadd.s32 %s205, 1
    %s207 = scalar_select %p204, %s205, %s206
    %p210 = pneg %p204
    %p211 = scmp.eq.s32.totalorder %s19, 1
    %p212 = por %p210, %p211
    %p213 = scmp.ne.s32.totalorder %s205, %s208
    %p214 = scmp.eq.s32.totalorder %s19, 0
    %p215 = por %p213, %p214
    %p216 = scmp.ne.s32.totalorder %s205, %s208
    %p217 = scmp.eq.s32.totalorder %s24, 1
    %p218 = por %p216, %p217
    %p219 = scmp.ne.s32.totalorder %s208, %s209
    %p220 = scmp.eq.s32.totalorder %s24, 0
    %p221 = por %p219, %p220
    %p222 = scmp.ne.s32.totalorder %s208, %s209
    %p223 = scmp.eq.s32.totalorder %s25, 1
    %p224 = por %p222, %p223
    %p226 = scmp.ne.s32.totalorder %s209, %s225
    %p227 = scmp.eq.s32.totalorder %s25, 0
    %p228 = por %p226, %p227
    %s230 = sadd.s32 %s229, 1
    %p233 = scmp.eq.s32.totalorder %s19, 1
    %p234 = scmp.ne.s32.totalorder %s229, %s231
    %p235 = scmp.eq.s32.totalorder %s19, 0
    %p236 = por %p234, %p235
    %p237 = scmp.ne.s32.totalorder %s229, %s231
    %p238 = scmp.eq.s32.totalorder %s24, 1
    %p239 = por %p237, %p238
    %p240 = scmp.ne.s32.totalorder %s231, %s232
    %p241 = scmp.eq.s32.totalorder %s24, 0
    %p242 = por %p240, %p241
    %p243 = scmp.ne.s32.totalorder %s231, %s232
    %p244 = scmp.eq.s32.totalorder %s25, 1
    %p245 = por %p243, %p244
    %p247 = scmp.ne.s32.totalorder %s232, %s246
    %p248 = scmp.eq.s32.totalorder %s25, 0
    %p249 = por %p247, %p248
    %s251 = sadd.s32 %s250, 1
    %p254 = scmp.eq.s32.totalorder %s19, 1
    %p255 = scmp.ne.s32.totalorder %s250, %s252
    %p256 = scmp.eq.s32.totalorder %s19, 0
    %p257 = por %p255, %p256
    %p258 = scmp.ne.s32.totalorder %s250, %s252
    %p259 = scmp.eq.s32.totalorder %s24, 1
    %p260 = por %p258, %p259
    %p261 = scmp.ne.s32.totalorder %s252, %s253
    %p262 = scmp.eq.s32.totalorder %s24, 0
    %p263 = por %p261, %p262
    %p264 = scmp.ne.s32.totalorder %s252, %s253
    %p265 = scmp.eq.s32.totalorder %s25, 1
    %p266 = por %p264, %p265
    %p268 = scmp.ne.s32.totalorder %s253, %s267
    %p269 = scmp.eq.s32.totalorder %s25, 0
    %p270 = por %p268, %p269
    %s272 = sadd.s32 %s271, 1
    %p275 = scmp.eq.s32.totalorder %s19, 1
    %p276 = scmp.ne.s32.totalorder %s271, %s273
    %p277 = scmp.eq.s32.totalorder %s19, 0
    %p278 = por %p276, %p277
    %p279 = scmp.ne.s32.totalorder %s271, %s273
    %p280 = scmp.eq.s32.totalorder %s24, 1
    %p281 = por %p279, %p280
    %p282 = scmp.ne.s32.totalorder %s273, %s274
    %p283 = scmp.eq.s32.totalorder %s24, 0
    %p284 = por %p282, %p283
    %p285 = scmp.ne.s32.totalorder %s273, %s274
    %p286 = scmp.eq.s32.totalorder %s25, 1
    %p287 = por %p285, %p286
    %p289 = scmp.ne.s32.totalorder %s274, %s288
    %p290 = scmp.eq.s32.totalorder %s25, 0
    %p291 = por %p289, %p290
    %s293 = sadd.s32 %s292, 1
    %p296 = scmp.eq.s32.totalorder %s19, 1
    %p297 = scmp.ne.s32.totalorder %s292, %s294
    %p298 = scmp.eq.s32.totalorder %s19, 0
    %p299 = por %p297, %p298
    %p300 = scmp.ne.s32.totalorder %s292, %s294
    %p301 = scmp.eq.s32.totalorder %s24, 1
    %p302 = por %p300, %p301
    %p303 = scmp.ne.s32.totalorder %s294, %s295
    %p304 = scmp.eq.s32.totalorder %s24, 0
    %p305 = por %p303, %p304
    %p306 = scmp.ne.s32.totalorder %s294, %s295
    %p307 = scmp.eq.s32.totalorder %s25, 1
    %p308 = por %p306, %p307
    %p310 = scmp.ne.s32.totalorder %s295, %s309
    %p311 = scmp.eq.s32.totalorder %s25, 0
    %p312 = por %p310, %p311
    %s313 = ssub.s32 %s26, %s45
    %s314 = ssub.s32 %s27, %s41
    %s315 = sor.u32 %s313, %s314
    %p316 = scmp.eq.s32.totalorder %s315, 0
    %s318 = sadd.s32 %s317, 1
    %s319 = scalar_select %p316, %s317, %s318
    %p322 = pneg %p316
    %p323 = scmp.eq.s32.totalorder %s19, 1
    %p324 = por %p322, %p323
    %p325 = scmp.ne.s32.totalorder %s317, %s320
    %p326 = scmp.eq.s32.totalorder %s19, 0
    %p327 = por %p325, %p326
    %p328 = scmp.ne.s32.totalorder %s317, %s320
    %p329 = scmp.eq.s32.totalorder %s24, 1
    %p330 = por %p328, %p329
    %p331 = scmp.ne.s32.totalorder %s320, %s321
    %p332 = scmp.eq.s32.totalorder %s24, 0
    %p333 = por %p331, %p332
    %p334 = scmp.ne.s32.totalorder %s320, %s321
    %p335 = scmp.eq.s32.totalorder %s25, 1
    %p336 = por %p334, %p335
    %p338 = scmp.ne.s32.totalorder %s321, %s337
    %p339 = scmp.eq.s32.totalorder %s25, 0
    %p340 = por %p338, %p339
    %s341 = ssub.s32 %s26, %s45
    %s342 = ssub.s32 %s27, %s41
    %s343 = sor.u32 %s341, %s342
    %p344 = scmp.eq.s32.totalorder %s343, 0
    %s346 = sadd.s32 %s345, 1
    %s347 = scalar_select %p344, %s345, %s346
    %p350 = pneg %p344
    %p351 = scmp.eq.s32.totalorder %s19, 1
    %p352 = por %p350, %p351
    %p353 = scmp.ne.s32.totalorder %s345, %s348
    %p354 = scmp.eq.s32.totalorder %s19, 0
    %p355 = por %p353, %p354
    %p356 = scmp.ne.s32.totalorder %s345, %s348
    %p357 = scmp.eq.s32.totalorder %s24, 1
    %p358 = por %p356, %p357
    %p359 = scmp.ne.s32.totalorder %s348, %s349
    %p360 = scmp.eq.s32.totalorder %s24, 0
    %p361 = por %p359, %p360
    %p362 = scmp.ne.s32.totalorder %s348, %s349
    %p363 = scmp.eq.s32.totalorder %s25, 1
    %p364 = por %p362, %p363
    %p366 = scmp.ne.s32.totalorder %s349, %s365
    %p367 = scmp.eq.s32.totalorder %s25, 0
    %p368 = por %p366, %p367
    %p369 = scmp.le.s32.totalorder 1, %s19
    %p370 = scmp.lt.s32.totalorder %s19, 3
    %p371 = pnand %p369, %p370
    %p372 = pneg %p371
    // Predicated region
    $region9: #{intermediate_i_s_forward.1} parent=5 // pred_check
      _
    $region10: #{intermediate_i_s_forward.1} parent=5 // pred_check_branch
      %374 = sbr.rel (%p371) target = $region12
    $region11: #{intermediate_i_s_forward.1} parent=5 // pred_region
      %s375 = ssub.s32 %s19, 1
      // Predicated region
      $region13: #{intermediate_i_s_forward.1} parent=11 // pred_check
        %p376 = pneg %p92
      $region14: #{intermediate_i_s_forward.1} parent=11 // pred_check_branch
        %378 = sbr.rel (%p376) target = $region16
      $region15: #{intermediate_i_s_forward.1} parent=11 // pred_region
        %p379 = scmp.lt.s32.totalorder %s31, 0
        %s380 = scalar_select %p379, %s31, 0
        %s381 = smul.addr %s380, 8
        %s382 = scalar_lea.vmem %s1, %s381
      $region16: #{intermediate_i_s_forward.1} parent=11 // pred_fallthru
        _
      // Predicated region
      $region17: #{intermediate_i_s_forward.1} parent=11 // pred_check
        %p383 = pneg %p118
      $region18: #{intermediate_i_s_forward.1} parent=11 // pred_check_branch
        %385 = sbr.rel (%p383) target = $region20
      $region19: #{intermediate_i_s_forward.1} parent=11 // pred_region
        %p386 = scmp.lt.s32.totalorder %s31, 0
        %s387 = scalar_select %p386, %s31, 0
        %s388 = scalar_lea.vmem %s2, %s387
      $region20: #{intermediate_i_s_forward.1} parent=11 // pred_fallthru
        _
      // Predicated region
      $region21: #{intermediate_i_s_forward.1} parent=11 // pred_check
        %p389 = pneg %p144
      $region22: #{intermediate_i_s_forward.1} parent=11 // pred_check_branch
        %391 = sbr.rel (%p389) target = $region24
      $region23: #{intermediate_i_s_forward.1} parent=11 // pred_region
        %s392 = smul.u32 16, %s31
        %p393 = scmp.lt.s32.totalorder %s392, 15
        %s394 = scalar_select %p393, %s392, 15
        %s395 = smul.addr %s394, 8
        %s396 = scalar_lea.vmem %s3, %s395
        %s397 = smul.u32 16, %s31
      $region24: #{intermediate_i_s_forward.1} parent=11 // pred_fallthru
        _
      // Predicated region
      $region25: #{intermediate_i_s_forward.1} parent=11 // pred_check
        %p398 = pneg %p165
      $region26: #{intermediate_i_s_forward.1} parent=11 // pred_check_branch
        %400 = sbr.rel (%p398) target = $region28
      $region27: #{intermediate_i_s_forward.1} parent=11 // pred_region
        _
      $region28: #{intermediate_i_s_forward.1} parent=11 // pred_fallthru
        _
      // Predicated region
      $region29: #{intermediate_i_s_forward.1} parent=11 // pred_check
        %p401 = pneg %p242
      $region30: #{intermediate_i_s_forward.1} parent=11 // pred_check_branch
        %403 = sbr.rel (%p401) target = $region32
      $region31: #{intermediate_i_s_forward.1} parent=11 // pred_region
        _
      $region32: #{intermediate_i_s_forward.1} parent=11 // pred_fallthru
        _
      // Predicated region
      $region33: #{intermediate_i_s_forward.1} parent=11 // pred_check
        %p404 = pneg %p263
      $region34: #{intermediate_i_s_forward.1} parent=11 // pred_check_branch
        %406 = sbr.rel (%p404) target = $region36
      $region35: #{intermediate_i_s_forward.1} parent=11 // pred_region
        _
      $region36: #{intermediate_i_s_forward.1} parent=11 // pred_fallthru
        _
      // Predicated region
      $region37: #{intermediate_i_s_forward.1} parent=11 // pred_check
        %p407 = pneg %p284
      $region38: #{intermediate_i_s_forward.1} parent=11 // pred_check_branch
        %409 = sbr.rel (%p407) target = $region40
      $region39: #{intermediate_i_s_forward.1} parent=11 // pred_region
        _
      $region40: #{intermediate_i_s_forward.1} parent=11 // pred_fallthru
        _
      // Predicated region
      $region41: #{intermediate_i_s_forward.1} parent=11 // pred_check
        %p410 = pneg %p305
      $region42: #{intermediate_i_s_forward.1} parent=11 // pred_check_branch
        %412 = sbr.rel (%p410) target = $region44
      $region43: #{intermediate_i_s_forward.1} parent=11 // pred_region
        _
      $region44: #{intermediate_i_s_forward.1} parent=11 // pred_fallthru
        _
    $region12: #{intermediate_i_s_forward.1} parent=5 // pred_fallthru
      _
    %p413 = scmp.lt.s32.totalorder %s19, 2
    // Predicated region
    $region45: #{intermediate_i_s_forward.1} parent=5 // pred_check
      %p414 = pneg %p413
    $region46: #{intermediate_i_s_forward.1} parent=5 // pred_check_branch
      %416 = sbr.rel (%p414) target = $region48
    $region47: #{intermediate_i_s_forward.1} parent=5 // pred_region
      // Predicated region
      $region49: #{intermediate_i_s_forward.1} parent=47 // pred_check
        %p417 = pneg %p60
      $region50: #{intermediate_i_s_forward.1} parent=47 // pred_check_branch
        %419 = sbr.rel (%p417) target = $region52
      $region51: #{intermediate_i_s_forward.1} parent=47 // pred_region
        %s420 = smul.u32 16, %s27
        %p421 = scmp.lt.s32.totalorder %s26, 1
        %s422 = scalar_select %p421, %s26, 1
        %p423 = scmp.lt.s32.totalorder %s420, 15
        %s424 = scalar_select %p423, %s420, 15
        %s425 = smul.addr %s424, 2
        %s426 = smul.addr %s422, 32
        %s427 = sadd.s32 %s425, %s426
        %s428 = smul.addr %s427, 8
        %s429 = scalar_lea.vmem %s0, %s428
        %s430 = smul.u32 16, %s27
      $region52: #{intermediate_i_s_forward.1} parent=47 // pred_fallthru
        _
      // Predicated region
      $region53: #{intermediate_i_s_forward.1} parent=47 // pred_check
        %p431 = pneg %p187
      $region54: #{intermediate_i_s_forward.1} parent=47 // pred_check_branch
        %433 = sbr.rel (%p431) target = $region56
      $region55: #{intermediate_i_s_forward.1} parent=47 // pred_region
        %s434 = smul.u32 16, %s27
        %p435 = scmp.lt.s32.totalorder %s26, 1
        %s436 = scalar_select %p435, %s26, 1
        %p437 = scmp.lt.s32.totalorder %s434, 15
        %s438 = scalar_select %p437, %s434, 15
        %s439 = smul.addr %s436, 16
        %s440 = sadd.s32 %s438, %s439
        %s441 = smul.addr %s440, 8
        %s442 = scalar_lea.vmem %s5, %s441
        %s443 = smul.u32 16, %s27
      $region56: #{intermediate_i_s_forward.1} parent=47 // pred_fallthru
        _
      // Predicated region
      $region57: #{intermediate_i_s_forward.1} parent=47 // pred_check
        %p444 = pneg %p215
      $region58: #{intermediate_i_s_forward.1} parent=47 // pred_check_branch
        %446 = sbr.rel (%p444) target = $region60
      $region59: #{intermediate_i_s_forward.1} parent=47 // pred_region
        %s447 = smul.u32 16, %s27
        %p448 = scmp.lt.s32.totalorder %s26, 1
        %s449 = scalar_select %p448, %s26, 1
        %p450 = scmp.lt.s32.totalorder %s447, 15
        %s451 = scalar_select %p450, %s447, 15
        %s452 = smul.addr %s449, 16
        %s453 = sadd.s32 %s451, %s452
        %s454 = smul.addr %s453, 8
        %s455 = scalar_lea.vmem %s6, %s454
        %s456 = smul.u32 16, %s27
      $region60: #{intermediate_i_s_forward.1} parent=47 // pred_fallthru
        _
    $region48: #{intermediate_i_s_forward.1} parent=5 // pred_fallthru
      _
    %p457 = scmp.le.s32.totalorder 1, %s19
    %p458 = scmp.lt.s32.totalorder %s19, 3
    %p459 = pnand %p457, %p458
    %p460 = pneg %p459
    // Predicated region
    $region61: #{intermediate_i_s_forward.1} parent=5 // pred_check
      _
    $region62: #{intermediate_i_s_forward.1} parent=5 // pred_check_branch
      %462 = sbr.rel (%p459) target = $region64
    $region63: #{intermediate_i_s_forward.1} parent=5 // pred_region
      %s463 = ssub.s32 %s19, 1
      %s464 = smul.u32 16, %s30
      %p465 = scmp.lt.s32.totalorder %s29, 1
      %s466 = scalar_select %p465, %s29, 1
      %p467 = scmp.lt.s32.totalorder %s464, 15
      %s468 = scalar_select %p467, %s464, 15
      %s469 = smul.addr %s468, 2
      %s470 = smul.addr %s466, 32
      %s471 = sadd.s32 %s469, %s470
      %s472 = smul.addr %s471, 8
      %s473 = scalar_lea.vmem %s0, %s472
      %p474 = pneg %p66
      %p475 = pneg %p63
      %p476 = scmp.lt.s32.totalorder %s31, 0
      %s477 = scalar_select %p476, %s31, 0
      %s478 = smul.addr %s477, 8
      %s479 = scalar_lea.vmem %s1, %s478
      %p480 = pneg %p92
      %p481 = pneg %p89
      %p482 = scmp.lt.s32.totalorder %s31, 0
      %s483 = scalar_select %p482, %s31, 0
      %s484 = scalar_lea.vmem %s2, %s483
      %p485 = pneg %p118
      %p486 = pneg %p115
      %s487 = smul.u32 16, %s31
      %p488 = scmp.lt.s32.totalorder %s487, 15
      %s489 = scalar_select %p488, %s487, 15
      %s490 = smul.addr %s489, 8
      %s491 = scalar_lea.vmem %s3, %s490
      %p492 = pneg %p144
      %p493 = pneg %p141
      %p494 = pneg %p165
      %p495 = pneg %p162
      %s496 = smul.u32 16, %s30
      %p497 = scmp.lt.s32.totalorder %s29, 1
      %s498 = scalar_select %p497, %s29, 1
      %p499 = scmp.lt.s32.totalorder %s496, 15
      %s500 = scalar_select %p499, %s496, 15
      %s501 = smul.addr %s498, 16
      %s502 = sadd.s32 %s500, %s501
      %s503 = smul.addr %s502, 8
      %s504 = scalar_lea.vmem %s5, %s503
      %p505 = pneg %p193
      %p506 = pneg %p190
      %s507 = smul.u32 16, %s30
      %p508 = scmp.lt.s32.totalorder %s29, 1
      %s509 = scalar_select %p508, %s29, 1
      %p510 = scmp.lt.s32.totalorder %s507, 15
      %s511 = scalar_select %p510, %s507, 15
      %s512 = smul.addr %s509, 16
      %s513 = sadd.s32 %s511, %s512
      %s514 = smul.addr %s513, 8
      %s515 = scalar_lea.vmem %s6, %s514
      %p516 = pneg %p221
      %p517 = pneg %p218
      %p518 = pneg %p242
      %p519 = pneg %p239
      %p520 = pneg %p263
      %p521 = pneg %p260
      %p522 = pneg %p284
      %p523 = pneg %p281
      %p524 = pneg %p305
      %p525 = pneg %p302
      %p526 = pneg %p333
      %p527 = pneg %p330
      %s528 = smul.u32 16, %s30
      %p529 = scmp.lt.s32.totalorder %s29, 1
      %s530 = scalar_select %p529, %s29, 1
      %p531 = scmp.lt.s32.totalorder %s528, 15
      %s532 = scalar_select %p531, %s528, 15
      %s533 = smul.addr %s530, 16
      %s534 = sadd.s32 %s532, %s533
      %s535 = smul.addr %s534, 8
      %s536 = scalar_lea.vmem %s11, %s535
      %p537 = pneg %p361
      %p538 = pneg %p358
      %s539 = smul.u32 16, %s30
      %p540 = scmp.lt.s32.totalorder %s29, 1
      %s541 = scalar_select %p540, %s29, 1
      %p542 = scmp.lt.s32.totalorder %s539, 15
      %s543 = scalar_select %p542, %s539, 15
      %s544 = smul.addr %s541, 16
      %s545 = sadd.s32 %s543, %s544
      %s546 = smul.addr %s545, 8
      %s547 = scalar_lea.vmem %s12, %s546
      %s548 = smul.u32 16, %s30
      %p549 = scmp.lt.s32.totalorder %s29, 1
      %s550 = scalar_select %p549, %s29, 1
      %p551 = scmp.lt.s32.totalorder %s548, 15
      %s552 = scalar_select %p551, %s548, 15
      %s553 = smul.addr %s552, 2
      %s554 = smul.addr %s550, 32
      %s555 = sadd.s32 %s553, %s554
      %s556 = smul.addr %s555, 8
      %s557 = scalar_lea.vmem %s0, %s556
      %s558 = smul.u32 16, %s30
      %p559 = scmp.lt.s32.totalorder %s31, 0
      %s560 = scalar_select %p559, %s31, 0
      %s561 = smul.addr %s560, 8
      %s562 = scalar_lea.vmem %s1, %s561
      %p563 = scmp.lt.s32.totalorder %s31, 0
      %s564 = scalar_select %p563, %s31, 0
      %s565 = scalar_lea.vmem %s2, %s564
      %s566 = smul.u32 16, %s31
      %p567 = scmp.lt.s32.totalorder %s566, 15
      %s568 = scalar_select %p567, %s566, 15
      %s569 = smul.addr %s568, 8
      %s570 = scalar_lea.vmem %s3, %s569
      %s571 = smul.u32 16, %s31
      %s572 = smul.u32 16, %s30
      %p573 = scmp.lt.s32.totalorder %s29, 1
      %s574 = scalar_select %p573, %s29, 1
      %p575 = scmp.lt.s32.totalorder %s572, 15
      %s576 = scalar_select %p575, %s572, 15
      %s577 = smul.addr %s574, 16
      %s578 = sadd.s32 %s576, %s577
      %s579 = smul.addr %s578, 8
      %s580 = scalar_lea.vmem %s5, %s579
      %s581 = smul.u32 16, %s30
      %s582 = smul.u32 16, %s30
      %p583 = scmp.lt.s32.totalorder %s29, 1
      %s584 = scalar_select %p583, %s29, 1
      %p585 = scmp.lt.s32.totalorder %s582, 15
      %s586 = scalar_select %p585, %s582, 15
      %s587 = smul.addr %s584, 16
      %s588 = sadd.s32 %s586, %s587
      %s589 = smul.addr %s588, 8
      %s590 = scalar_lea.vmem %s6, %s589
      %s591 = smul.u32 16, %s30
      %s592 = smul.u32 16, %s30
      %p593 = scmp.lt.s32.totalorder %s29, 1
      %s594 = scalar_select %p593, %s29, 1
      %p595 = scmp.lt.s32.totalorder %s592, 15
      %s596 = scalar_select %p595, %s592, 15
      %s597 = smul.addr %s594, 16
      %s598 = sadd.s32 %s596, %s597
      %s599 = smul.addr %s598, 8
      %s600 = scalar_lea.vmem %s11, %s599
      %s601 = smul.u32 16, %s30
      %s602 = smul.u32 16, %s30
      %p603 = scmp.lt.s32.totalorder %s29, 1
      %s604 = scalar_select %p603, %s29, 1
      %p605 = scmp.lt.s32.totalorder %s602, 15
      %s606 = scalar_select %p605, %s602, 15
      %s607 = smul.addr %s604, 16
      %s608 = sadd.s32 %s606, %s607
      %s609 = smul.addr %s608, 8
      %s610 = scalar_lea.vmem %s12, %s609
      %s611 = smul.u32 16, %s30
      %p612 = scmp.eq.s32.totalorder %s31, 0
      // Predicated region
      $region65: #{intermediate_i_s_forward.1} parent=63 // pred_check
        %p613 = pneg %p612
      $region66: #{intermediate_i_s_forward.1} parent=63 // pred_check_branch
        %615 = sbr.rel (%p613) target = $region68
      $region67: #{intermediate_i_s_forward.1} parent=63 // pred_region
        %vm616 = vcmask 261120
        %617 = vst.msk [vmem:[#allocation2] sm:$0xff] %vm616, 0.0
        %618 = vst.msk [vmem:[#allocation2 + $0x8] sm:$0xff] %vm616, 0.0
        %619 = vst.msk [vmem:[#allocation2 + $0x10] sm:$0xff] %vm616, 0.0
        %620 = vst.msk [vmem:[#allocation2 + $0x18] sm:$0xff] %vm616, 0.0
        %621 = vst.msk [vmem:[#allocation2 + $0x20] sm:$0xff] %vm616, 0.0
        %622 = vst.msk [vmem:[#allocation2 + $0x28] sm:$0xff] %vm616, 0.0
        %623 = vst.msk [vmem:[#allocation2 + $0x30] sm:$0xff] %vm616, 0.0
        %624 = vst.msk [vmem:[#allocation2 + $0x38] sm:$0xff] %vm616, 0.0
        %625 = vst.msk [vmem:[#allocation2 + $0x40] sm:$0xff] %vm616, 0.0
        %626 = vst.msk [vmem:[#allocation2 + $0x48] sm:$0xff] %vm616, 0.0
        %627 = vst.msk [vmem:[#allocation2 + $0x50] sm:$0xff] %vm616, 0.0
        %628 = vst.msk [vmem:[#allocation2 + $0x58] sm:$0xff] %vm616, 0.0
        %629 = vst.msk [vmem:[#allocation2 + $0x60] sm:$0xff] %vm616, 0.0
        %630 = vst.msk [vmem:[#allocation2 + $0x68] sm:$0xff] %vm616, 0.0
        %631 = vst.msk [vmem:[#allocation2 + $0x70] sm:$0xff] %vm616, 0.0
        %632 = vst.msk [vmem:[#allocation2 + $0x78] sm:$0xff] %vm616, 0.0
      $region68: #{intermediate_i_s_forward.1} parent=63 // pred_fallthru
        _
      %v633 = vld [vmem:[%s557] sm:$0xff]
      %v634 = vld [vmem:[%s557 + $0x8] sm:$0xff]
      %v635 = vld [vmem:[%s557 + $0x10] sm:$0xff]
      %v636 = vld [vmem:[%s557 + $0x18] sm:$0xff]
      %v637 = vld [vmem:[%s557 + $0x20] sm:$0xff]
      %v638 = vld [vmem:[%s557 + $0x28] sm:$0xff]
      %v639 = vld [vmem:[%s557 + $0x30] sm:$0xff]
      %v640 = vld [vmem:[%s557 + $0x38] sm:$0xff]
      %v641 = vld [vmem:[%s557 + $0x40] sm:$0xff]
      %v642 = vld [vmem:[%s557 + $0x48] sm:$0xff]
      %v643 = vld [vmem:[%s557 + $0x50] sm:$0xff]
      %v644 = vld [vmem:[%s557 + $0x58] sm:$0xff]
      %v645 = vld [vmem:[%s557 + $0x60] sm:$0xff]
      %v646 = vld [vmem:[%s557 + $0x68] sm:$0xff]
      %v647 = vld [vmem:[%s557 + $0x70] sm:$0xff]
      %v648 = vld [vmem:[%s557 + $0x78] sm:$0xff]
      %v649 = vld [vmem:[%s557 + $0x80] sm:$0xff]
      %v650 = vld [vmem:[%s557 + $0x88] sm:$0xff]
      %v651 = vld [vmem:[%s557 + $0x90] sm:$0xff]
      %v652 = vld [vmem:[%s557 + $0x98] sm:$0xff]
      %v653 = vld [vmem:[%s557 + $0xa0] sm:$0xff]
      %v654 = vld [vmem:[%s557 + $0xa8] sm:$0xff]
      %v655 = vld [vmem:[%s557 + $0xb0] sm:$0xff]
      %v656 = vld [vmem:[%s557 + $0xb8] sm:$0xff]
      %v657 = vld [vmem:[%s557 + $0xc0] sm:$0xff]
      %v658 = vld [vmem:[%s557 + $0xc8] sm:$0xff]
      %v659 = vld [vmem:[%s557 + $0xd0] sm:$0xff]
      %v660 = vld [vmem:[%s557 + $0xd8] sm:$0xff]
      %v661 = vld [vmem:[%s557 + $0xe0] sm:$0xff]
      %v662 = vld [vmem:[%s557 + $0xe8] sm:$0xff]
      %v663 = vld [vmem:[%s557 + $0xf0] sm:$0xff]
      %v664 = vld [vmem:[%s557 + $0xf8] sm:$0xff]
      %v665 = vld [vmem:[%s562] sm:$0xff]
      %v666 = vld [vmem:[%s562 + $0x8] sm:$0xff]
      %v667 = vld [vmem:[%s562 + $0x10] sm:$0xff]
      %v668 = vld [vmem:[%s562 + $0x18] sm:$0xff]
      %v669 = vld [vmem:[%s562 + $0x20] sm:$0xff]
      %v670 = vld [vmem:[%s562 + $0x28] sm:$0xff]
      %v671 = vld [vmem:[%s562 + $0x30] sm:$0xff]
      %v672 = vld [vmem:[%s562 + $0x38] sm:$0xff]
      %v673 = vld [vmem:[%s562 + $0x40] sm:$0xff]
      %v674 = vld [vmem:[%s562 + $0x48] sm:$0xff]
      %v675 = vld [vmem:[%s562 + $0x50] sm:$0xff]
      %v676 = vld [vmem:[%s562 + $0x58] sm:$0xff]
      %v677 = vld [vmem:[%s562 + $0x60] sm:$0xff]
      %v678 = vld [vmem:[%s562 + $0x68] sm:$0xff]
      %v679 = vld [vmem:[%s562 + $0x70] sm:$0xff]
      %v680 = vld [vmem:[%s562 + $0x78] sm:$0xff]
      %v681 = vld [vmem:[%s562 + $0x80] sm:$0xff]
      %v682 = vld [vmem:[%s562 + $0x88] sm:$0xff]
      %v683 = vld [vmem:[%s562 + $0x90] sm:$0xff]
      %v684 = vld [vmem:[%s562 + $0x98] sm:$0xff]
      %v685 = vld [vmem:[%s562 + $0xa0] sm:$0xff]
      %v686 = vld [vmem:[%s562 + $0xa8] sm:$0xff]
      %v687 = vld [vmem:[%s562 + $0xb0] sm:$0xff]
      %v688 = vld [vmem:[%s562 + $0xb8] sm:$0xff]
      %v689 = vld [vmem:[%s565] sm:$0x1]
      %v691 = vperm.slane %v689, 0
      %vm693 = vcmask 523264
      %v695 = vsel %vm693, %v634, 0
      %v698 = vsel %vm693, %v636, 0
      %v701 = vsel %vm693, %v638, 0
      %v704 = vsel %vm693, %v640, 0
      %v707 = vsel %vm693, %v642, 0
      %v710 = vsel %vm693, %v644, 0
      %v713 = vsel %vm693, %v646, 0
      %v716 = vsel %vm693, %v648, 0
      %v719 = vsel %vm693, %v650, 0
      %v722 = vsel %vm693, %v652, 0
      %v725 = vsel %vm693, %v654, 0
      %v728 = vsel %vm693, %v656, 0
      %v731 = vsel %vm693, %v658, 0
      %v734 = vsel %vm693, %v660, 0
      %v737 = vsel %vm693, %v662, 0
      %v740 = vsel %vm693, %v664, 0
      %742 = vmatpush.msra.mxu0 %v680
      %743 = vmatpush.msra.mxu0 %v679
      %744 = vmatpush.msra.mxu0 %v678
      %745 = vmatpush.msra.mxu0 %v677
      %746 = vmatpush.msra.mxu0 %v676
      %747 = vmatpush.msra.mxu0 %v675
      %748 = vmatpush.msra.mxu0 %v674
      %749 = vmatpush.msra.mxu0 %v673
      %750 = vmatpush.msra.mxu0 %v672
      %751 = vmatpush.msra.mxu0 %v671
      %752 = vmatpush.msra.mxu0 %v670
      %753 = vmatpush.msra.mxu0 %v669
      %754 = vmatpush.msra.mxu0 %v668
      %755 = vmatpush.msra.mxu0 %v667
      %756 = vmatpush.msra.mxu0 %v666
      %757 = vmatpush.msra.mxu0 %v665
      %758 = vmatmul.f32.gmra.mxu0 %v633
      %v759 = vpop.f32.mrf.mxu0
      %v760 = vadd.f32 %v691, %v759
      %761 = vmatmul.f32.gmra.mxu0 %v635
      %v762 = vpop.f32.mrf.mxu0
      %v763 = vadd.f32 %v691, %v762
      %764 = vmatmul.f32.gmra.mxu0 %v637
      %v765 = vpop.f32.mrf.mxu0
      %v766 = vadd.f32 %v691, %v765
      %767 = vmatmul.f32.gmra.mxu0 %v639
      %v768 = vpop.f32.mrf.mxu0
      %v769 = vadd.f32 %v691, %v768
      %770 = vmatmul.f32.gmra.mxu0 %v641
      %v771 = vpop.f32.mrf.mxu0
      %v772 = vadd.f32 %v691, %v771
      %773 = vmatmul.f32.gmra.mxu0 %v643
      %v774 = vpop.f32.mrf.mxu0
      %v775 = vadd.f32 %v691, %v774
      %776 = vmatmul.f32.gmra.mxu0 %v645
      %v777 = vpop.f32.mrf.mxu0
      %v778 = vadd.f32 %v691, %v777
      %779 = vmatmul.f32.gmra.mxu0 %v647
      %v780 = vpop.f32.mrf.mxu0
      %v781 = vadd.f32 %v691, %v780
      %782 = vmatmul.f32.gmra.mxu0 %v649
      %v783 = vpop.f32.mrf.mxu0
      %v784 = vadd.f32 %v691, %v783
      %785 = vmatmul.f32.gmra.mxu0 %v651
      %v786 = vpop.f32.mrf.mxu0
      %v787 = vadd.f32 %v691, %v786
      %788 = vmatmul.f32.gmra.mxu0 %v653
      %v789 = vpop.f32.mrf.mxu0
      %v790 = vadd.f32 %v691, %v789
      %791 = vmatmul.f32.gmra.mxu0 %v655
      %v792 = vpop.f32.mrf.mxu0
      %v793 = vadd.f32 %v691, %v792
      %794 = vmatmul.f32.gmra.mxu0 %v657
      %v795 = vpop.f32.mrf.mxu0
      %v796 = vadd.f32 %v691, %v795
      %797 = vmatmul.f32.gmra.mxu0 %v659
      %v798 = vpop.f32.mrf.mxu0
      %v799 = vadd.f32 %v691, %v798
      %800 = vmatmul.f32.gmra.mxu0 %v661
      %v801 = vpop.f32.mrf.mxu0
      %v802 = vadd.f32 %v691, %v801
      %803 = vmatmul.f32.gmra.mxu0 %v663
      %v804 = vpop.f32.mrf.mxu0
      %v805 = vadd.f32 %v691, %v804
      %806 = vdwg.mxu0
      %807 = vmatpush.msra.mxu0 0.0
      %808 = vmatpush.msra.mxu0 0.0
      %809 = vmatpush.msra.mxu0 0.0
      %810 = vmatpush.msra.mxu0 0.0
      %811 = vmatpush.msra.mxu0 0.0
      %812 = vmatpush.msra.mxu0 0.0
      %813 = vmatpush.msra.mxu0 0.0
      %814 = vmatpush.msra.mxu0 0.0
      %815 = vmatpush.msra.mxu0 %v688
      %816 = vmatpush.msra.mxu0 %v687
      %817 = vmatpush.msra.mxu0 %v686
      %818 = vmatpush.msra.mxu0 %v685
      %819 = vmatpush.msra.mxu0 %v684
      %820 = vmatpush.msra.mxu0 %v683
      %821 = vmatpush.msra.mxu0 %v682
      %822 = vmatpush.msra.mxu0 %v681
      %823 = vmatmul.f32.gmra.mxu0 %v695
      %v824 = vpop.f32.mrf.mxu0
      %v825 = vadd.f32 %v760, %v824
      %826 = vmatmul.f32.gmra.mxu0 %v698
      %v827 = vpop.f32.mrf.mxu0
      %v828 = vadd.f32 %v763, %v827
      %829 = vmatmul.f32.gmra.mxu0 %v701
      %v830 = vpop.f32.mrf.mxu0
      %v831 = vadd.f32 %v766, %v830
      %832 = vmatmul.f32.gmra.mxu0 %v704
      %v833 = vpop.f32.mrf.mxu0
      %v834 = vadd.f32 %v769, %v833
      %835 = vmatmul.f32.gmra.mxu0 %v707
      %v836 = vpop.f32.mrf.mxu0
      %v837 = vadd.f32 %v772, %v836
      %838 = vmatmul.f32.gmra.mxu0 %v710
      %v839 = vpop.f32.mrf.mxu0
      %v840 = vadd.f32 %v775, %v839
      %841 = vmatmul.f32.gmra.mxu0 %v713
      %v842 = vpop.f32.mrf.mxu0
      %v843 = vadd.f32 %v778, %v842
      %844 = vmatmul.f32.gmra.mxu0 %v716
      %v845 = vpop.f32.mrf.mxu0
      %v846 = vadd.f32 %v781, %v845
      %847 = vmatmul.f32.gmra.mxu0 %v719
      %v848 = vpop.f32.mrf.mxu0
      %v849 = vadd.f32 %v784, %v848
      %850 = vmatmul.f32.gmra.mxu0 %v722
      %v851 = vpop.f32.mrf.mxu0
      %v852 = vadd.f32 %v787, %v851
      %853 = vmatmul.f32.gmra.mxu0 %v725
      %v854 = vpop.f32.mrf.mxu0
      %v855 = vadd.f32 %v790, %v854
      %856 = vmatmul.f32.gmra.mxu0 %v728
      %v857 = vpop.f32.mrf.mxu0
      %v858 = vadd.f32 %v793, %v857
      %859 = vmatmul.f32.gmra.mxu0 %v731
      %v860 = vpop.f32.mrf.mxu0
      %v861 = vadd.f32 %v796, %v860
      %862 = vmatmul.f32.gmra.mxu0 %v734
      %v863 = vpop.f32.mrf.mxu0
      %v864 = vadd.f32 %v799, %v863
      %865 = vmatmul.f32.gmra.mxu0 %v737
      %v866 = vpop.f32.mrf.mxu0
      %v867 = vadd.f32 %v802, %v866
      %868 = vmatmul.f32.gmra.mxu0 %v740
      %v869 = vpop.f32.mrf.mxu0
      %v870 = vadd.f32 %v805, %v869
      %871 = vdwg.mxu0
      %v872 = vmax.f32 %v825, 0.0
      %v873 = vmax.f32 %v828, 0.0
      %v874 = vmax.f32 %v831, 0.0
      %v875 = vmax.f32 %v834, 0.0
      %v876 = vmax.f32 %v837, 0.0
      %v877 = vmax.f32 %v840, 0.0
      %v878 = vmax.f32 %v843, 0.0
      %v879 = vmax.f32 %v846, 0.0
      %v880 = vmax.f32 %v849, 0.0
      %v881 = vmax.f32 %v852, 0.0
      %v882 = vmax.f32 %v855, 0.0
      %v883 = vmax.f32 %v858, 0.0
      %v884 = vmax.f32 %v861, 0.0
      %v885 = vmax.f32 %v864, 0.0
      %v886 = vmax.f32 %v867, 0.0
      %v887 = vmax.f32 %v870, 0.0
      %v888 = vld [vmem:[#allocation2] sm:$0xff]
      %v889 = vld [vmem:[#allocation2 + $0x8] sm:$0xff]
      %v890 = vld [vmem:[#allocation2 + $0x10] sm:$0xff]
      %v891 = vld [vmem:[#allocation2 + $0x18] sm:$0xff]
      %v892 = vld [vmem:[#allocation2 + $0x20] sm:$0xff]
      %v893 = vld [vmem:[#allocation2 + $0x28] sm:$0xff]
      %v894 = vld [vmem:[#allocation2 + $0x30] sm:$0xff]
      %v895 = vld [vmem:[#allocation2 + $0x38] sm:$0xff]
      %v896 = vld [vmem:[#allocation2 + $0x40] sm:$0xff]
      %v897 = vld [vmem:[#allocation2 + $0x48] sm:$0xff]
      %v898 = vld [vmem:[#allocation2 + $0x50] sm:$0xff]
      %v899 = vld [vmem:[#allocation2 + $0x58] sm:$0xff]
      %v900 = vld [vmem:[#allocation2 + $0x60] sm:$0xff]
      %v901 = vld [vmem:[#allocation2 + $0x68] sm:$0xff]
      %v902 = vld [vmem:[#allocation2 + $0x70] sm:$0xff]
      %v903 = vld [vmem:[#allocation2 + $0x78] sm:$0xff]
      %v904 = vld [vmem:[%s570] sm:$0xff]
      %v905 = vld [vmem:[%s570 + $0x8] sm:$0xff]
      %v906 = vld [vmem:[%s570 + $0x10] sm:$0xff]
      %v907 = vld [vmem:[%s570 + $0x18] sm:$0xff]
      %v908 = vld [vmem:[%s570 + $0x20] sm:$0xff]
      %v909 = vld [vmem:[%s570 + $0x28] sm:$0xff]
      %v910 = vld [vmem:[%s570 + $0x30] sm:$0xff]
      %v911 = vld [vmem:[%s570 + $0x38] sm:$0xff]
      %v912 = vld [vmem:[%s570 + $0x40] sm:$0xff]
      %v913 = vld [vmem:[%s570 + $0x48] sm:$0xff]
      %v914 = vld [vmem:[%s570 + $0x50] sm:$0xff]
      %v915 = vld [vmem:[%s570 + $0x58] sm:$0xff]
      %v916 = vld [vmem:[%s570 + $0x60] sm:$0xff]
      %v917 = vld [vmem:[%s570 + $0x68] sm:$0xff]
      %v918 = vld [vmem:[%s570 + $0x70] sm:$0xff]
      %v919 = vld [vmem:[%s570 + $0x78] sm:$0xff]
      %920 = vmatpush.msra.mxu0 %v919
      %921 = vmatpush.msra.mxu0 %v918
      %922 = vmatpush.msra.mxu0 %v917
      %923 = vmatpush.msra.mxu0 %v916
      %924 = vmatpush.msra.mxu0 %v915
      %925 = vmatpush.msra.mxu0 %v914
      %926 = vmatpush.msra.mxu0 %v913
      %927 = vmatpush.msra.mxu0 %v912
      %928 = vmatpush.msra.mxu0 %v911
      %929 = vmatpush.msra.mxu0 %v910
      %930 = vmatpush.msra.mxu0 %v909
      %931 = vmatpush.msra.mxu0 %v908
      %932 = vmatpush.msra.mxu0 %v907
      %933 = vmatpush.msra.mxu0 %v906
      %934 = vmatpush.msra.mxu0 %v905
      %935 = vmatpush.msra.mxu0 %v904
      %936 = vmatmul.f32.gmra.mxu0 %v872
      %v937 = vpop.f32.mrf.mxu0
      %v938 = vadd.f32 0.0, %v937
      %939 = vmatmul.f32.gmra.mxu0 %v873
      %v940 = vpop.f32.mrf.mxu0
      %v941 = vadd.f32 0.0, %v940
      %942 = vmatmul.f32.gmra.mxu0 %v874
      %v943 = vpop.f32.mrf.mxu0
      %v944 = vadd.f32 0.0, %v943
      %945 = vmatmul.f32.gmra.mxu0 %v875
      %v946 = vpop.f32.mrf.mxu0
      %v947 = vadd.f32 0.0, %v946
      %948 = vmatmul.f32.gmra.mxu0 %v876
      %v949 = vpop.f32.mrf.mxu0
      %v950 = vadd.f32 0.0, %v949
      %951 = vmatmul.f32.gmra.mxu0 %v877
      %v952 = vpop.f32.mrf.mxu0
      %v953 = vadd.f32 0.0, %v952
      %954 = vmatmul.f32.gmra.mxu0 %v878
      %v955 = vpop.f32.mrf.mxu0
      %v956 = vadd.f32 0.0, %v955
      %957 = vmatmul.f32.gmra.mxu0 %v879
      %v958 = vpop.f32.mrf.mxu0
      %v959 = vadd.f32 0.0, %v958
      %960 = vmatmul.f32.gmra.mxu0 %v880
      %v961 = vpop.f32.mrf.mxu0
      %v962 = vadd.f32 0.0, %v961
      %963 = vmatmul.f32.gmra.mxu0 %v881
      %v964 = vpop.f32.mrf.mxu0
      %v965 = vadd.f32 0.0, %v964
      %966 = vmatmul.f32.gmra.mxu0 %v882
      %v967 = vpop.f32.mrf.mxu0
      %v968 = vadd.f32 0.0, %v967
      %969 = vmatmul.f32.gmra.mxu0 %v883
      %v970 = vpop.f32.mrf.mxu0
      %v971 = vadd.f32 0.0, %v970
      %972 = vmatmul.f32.gmra.mxu0 %v884
      %v973 = vpop.f32.mrf.mxu0
      %v974 = vadd.f32 0.0, %v973
      %975 = vmatmul.f32.gmra.mxu0 %v885
      %v976 = vpop.f32.mrf.mxu0
      %v977 = vadd.f32 0.0, %v976
      %978 = vmatmul.f32.gmra.mxu0 %v886
      %v979 = vpop.f32.mrf.mxu0
      %v980 = vadd.f32 0.0, %v979
      %981 = vmatmul.f32.gmra.mxu0 %v887
      %v982 = vpop.f32.mrf.mxu0
      %v983 = vadd.f32 0.0, %v982
      %984 = vdwg.mxu0
      %v985 = vadd.f32 %v888, %v938
      %v986 = vadd.f32 %v889, %v941
      %v987 = vadd.f32 %v890, %v944
      %v988 = vadd.f32 %v891, %v947
      %v989 = vadd.f32 %v892, %v950
      %v990 = vadd.f32 %v893, %v953
      %v991 = vadd.f32 %v894, %v956
      %v992 = vadd.f32 %v895, %v959
      %v993 = vadd.f32 %v896, %v962
      %v994 = vadd.f32 %v897, %v965
      %v995 = vadd.f32 %v898, %v968
      %v996 = vadd.f32 %v899, %v971
      %v997 = vadd.f32 %v900, %v974
      %v998 = vadd.f32 %v901, %v977
      %v999 = vadd.f32 %v902, %v980
      %v1000 = vadd.f32 %v903, %v983
      %vm1001 = vcmask 261120
      %1002 = vst.msk [vmem:[#allocation2] sm:$0xff] %vm1001, %v985
      %1003 = vst.msk [vmem:[#allocation2 + $0x8] sm:$0xff] %vm1001, %v986
      %1004 = vst.msk [vmem:[#allocation2 + $0x10] sm:$0xff] %vm1001, %v987
      %1005 = vst.msk [vmem:[#allocation2 + $0x18] sm:$0xff] %vm1001, %v988
      %1006 = vst.msk [vmem:[#allocation2 + $0x20] sm:$0xff] %vm1001, %v989
      %1007 = vst.msk [vmem:[#allocation2 + $0x28] sm:$0xff] %vm1001, %v990
      %1008 = vst.msk [vmem:[#allocation2 + $0x30] sm:$0xff] %vm1001, %v991
      %1009 = vst.msk [vmem:[#allocation2 + $0x38] sm:$0xff] %vm1001, %v992
      %1010 = vst.msk [vmem:[#allocation2 + $0x40] sm:$0xff] %vm1001, %v993
      %1011 = vst.msk [vmem:[#allocation2 + $0x48] sm:$0xff] %vm1001, %v994
      %1012 = vst.msk [vmem:[#allocation2 + $0x50] sm:$0xff] %vm1001, %v995
      %1013 = vst.msk [vmem:[#allocation2 + $0x58] sm:$0xff] %vm1001, %v996
      %1014 = vst.msk [vmem:[#allocation2 + $0x60] sm:$0xff] %vm1001, %v997
      %1015 = vst.msk [vmem:[#allocation2 + $0x68] sm:$0xff] %vm1001, %v998
      %1016 = vst.msk [vmem:[#allocation2 + $0x70] sm:$0xff] %vm1001, %v999
      %1017 = vst.msk [vmem:[#allocation2 + $0x78] sm:$0xff] %vm1001, %v1000
      // Predicated region
      $region69: #{intermediate_i_s_forward.1} parent=63 // pred_check
        %p1018 = pneg %p612
      $region70: #{intermediate_i_s_forward.1} parent=63 // pred_check_branch
        %1020 = sbr.rel (%p1018) target = $region72
      $region71: #{intermediate_i_s_forward.1} parent=63 // pred_region
        %v1021 = vld [vmem:[#allocation2] sm:$0xff]
        %v1022 = vld [vmem:[#allocation2 + $0x8] sm:$0xff]
        %v1023 = vld [vmem:[#allocation2 + $0x10] sm:$0xff]
        %v1024 = vld [vmem:[#allocation2 + $0x18] sm:$0xff]
        %v1025 = vld [vmem:[#allocation2 + $0x20] sm:$0xff]
        %v1026 = vld [vmem:[#allocation2 + $0x28] sm:$0xff]
        %v1027 = vld [vmem:[#allocation2 + $0x30] sm:$0xff]
        %v1028 = vld [vmem:[#allocation2 + $0x38] sm:$0xff]
        %v1029 = vld [vmem:[#allocation2 + $0x40] sm:$0xff]
        %v1030 = vld [vmem:[#allocation2 + $0x48] sm:$0xff]
        %v1031 = vld [vmem:[#allocation2 + $0x50] sm:$0xff]
        %v1032 = vld [vmem:[#allocation2 + $0x58] sm:$0xff]
        %v1033 = vld [vmem:[#allocation2 + $0x60] sm:$0xff]
        %v1034 = vld [vmem:[#allocation2 + $0x68] sm:$0xff]
        %v1035 = vld [vmem:[#allocation2 + $0x70] sm:$0xff]
        %v1036 = vld [vmem:[#allocation2 + $0x78] sm:$0xff]
        %v1037 = vld [vmem:[%s4] sm:$0x1]
        %v1039 = vperm.slane %v1037, 0
        %v1041 = vadd.f32 %v1021, %v1039
        %v1042 = vadd.f32 %v1022, %v1039
        %v1043 = vadd.f32 %v1023, %v1039
        %v1044 = vadd.f32 %v1024, %v1039
        %v1045 = vadd.f32 %v1025, %v1039
        %v1046 = vadd.f32 %v1026, %v1039
        %v1047 = vadd.f32 %v1027, %v1039
        %v1048 = vadd.f32 %v1028, %v1039
        %v1049 = vadd.f32 %v1029, %v1039
        %v1050 = vadd.f32 %v1030, %v1039
        %v1051 = vadd.f32 %v1031, %v1039
        %v1052 = vadd.f32 %v1032, %v1039
        %v1053 = vadd.f32 %v1033, %v1039
        %v1054 = vadd.f32 %v1034, %v1039
        %v1055 = vadd.f32 %v1035, %v1039
        %v1056 = vadd.f32 %v1036, %v1039
        %v1057 = vld [vmem:[%s580] sm:$0xff]
        %v1058 = vld [vmem:[%s580 + $0x8] sm:$0xff]
        %v1059 = vld [vmem:[%s580 + $0x10] sm:$0xff]
        %v1060 = vld [vmem:[%s580 + $0x18] sm:$0xff]
        %v1061 = vld [vmem:[%s580 + $0x20] sm:$0xff]
        %v1062 = vld [vmem:[%s580 + $0x28] sm:$0xff]
        %v1063 = vld [vmem:[%s580 + $0x30] sm:$0xff]
        %v1064 = vld [vmem:[%s580 + $0x38] sm:$0xff]
        %v1065 = vld [vmem:[%s580 + $0x40] sm:$0xff]
        %v1066 = vld [vmem:[%s580 + $0x48] sm:$0xff]
        %v1067 = vld [vmem:[%s580 + $0x50] sm:$0xff]
        %v1068 = vld [vmem:[%s580 + $0x58] sm:$0xff]
        %v1069 = vld [vmem:[%s580 + $0x60] sm:$0xff]
        %v1070 = vld [vmem:[%s580 + $0x68] sm:$0xff]
        %v1071 = vld [vmem:[%s580 + $0x70] sm:$0xff]
        %v1072 = vld [vmem:[%s580 + $0x78] sm:$0xff]
        %v1073 = vadd.f32 %v1041, %v1057
        %v1074 = vadd.f32 %v1042, %v1058
        %v1075 = vadd.f32 %v1043, %v1059
        %v1076 = vadd.f32 %v1044, %v1060
        %v1077 = vadd.f32 %v1045, %v1061
        %v1078 = vadd.f32 %v1046, %v1062
        %v1079 = vadd.f32 %v1047, %v1063
        %v1080 = vadd.f32 %v1048, %v1064
        %v1081 = vadd.f32 %v1049, %v1065
        %v1082 = vadd.f32 %v1050, %v1066
        %v1083 = vadd.f32 %v1051, %v1067
        %v1084 = vadd.f32 %v1052, %v1068
        %v1085 = vadd.f32 %v1053, %v1069
        %v1086 = vadd.f32 %v1054, %v1070
        %v1087 = vadd.f32 %v1055, %v1071
        %v1088 = vadd.f32 %v1056, %v1072
        %v1089 = vld [vmem:[%s590] sm:$0xff]
        %v1090 = vld [vmem:[%s590 + $0x8] sm:$0xff]
        %v1091 = vld [vmem:[%s590 + $0x10] sm:$0xff]
        %v1092 = vld [vmem:[%s590 + $0x18] sm:$0xff]
        %v1093 = vld [vmem:[%s590 + $0x20] sm:$0xff]
        %v1094 = vld [vmem:[%s590 + $0x28] sm:$0xff]
        %v1095 = vld [vmem:[%s590 + $0x30] sm:$0xff]
        %v1096 = vld [vmem:[%s590 + $0x38] sm:$0xff]
        %v1097 = vld [vmem:[%s590 + $0x40] sm:$0xff]
        %v1098 = vld [vmem:[%s590 + $0x48] sm:$0xff]
        %v1099 = vld [vmem:[%s590 + $0x50] sm:$0xff]
        %v1100 = vld [vmem:[%s590 + $0x58] sm:$0xff]
        %v1101 = vld [vmem:[%s590 + $0x60] sm:$0xff]
        %v1102 = vld [vmem:[%s590 + $0x68] sm:$0xff]
        %v1103 = vld [vmem:[%s590 + $0x70] sm:$0xff]
        %v1104 = vld [vmem:[%s590 + $0x78] sm:$0xff]
        %v1105 = vadd.f32 %v1041, %v1089
        %v1106 = vadd.f32 %v1042, %v1090
        %v1107 = vadd.f32 %v1043, %v1091
        %v1108 = vadd.f32 %v1044, %v1092
        %v1109 = vadd.f32 %v1045, %v1093
        %v1110 = vadd.f32 %v1046, %v1094
        %v1111 = vadd.f32 %v1047, %v1095
        %v1112 = vadd.f32 %v1048, %v1096
        %v1113 = vadd.f32 %v1049, %v1097
        %v1114 = vadd.f32 %v1050, %v1098
        %v1115 = vadd.f32 %v1051, %v1099
        %v1116 = vadd.f32 %v1052, %v1100
        %v1117 = vadd.f32 %v1053, %v1101
        %v1118 = vadd.f32 %v1054, %v1102
        %v1119 = vadd.f32 %v1055, %v1103
        %v1120 = vadd.f32 %v1056, %v1104
        %v1121 = vld [vmem:[%s7] sm:$0x1]
        %v1122 = vld [vmem:[%s8] sm:$0x1]
        %v1123 = vsel %vm1001, %v1073, 0.0
        %1124 = vadd.xlane.f32.xlu0 %v1123
        %v1125 = vpop.xlane.xlu0 %1124
        %v1126 = vsel %vm1001, %v1074, 0.0
        %1127 = vadd.xlane.f32.xlu0 %v1126
        %v1128 = vpop.xlane.xlu0 %1127
        %v1129 = vsel %vm1001, %v1075, 0.0
        %1130 = vadd.xlane.f32.xlu0 %v1129
        %v1131 = vpop.xlane.xlu0 %1130
        %v1132 = vsel %vm1001, %v1076, 0.0
        %1133 = vadd.xlane.f32.xlu0 %v1132
        %v1134 = vpop.xlane.xlu0 %1133
        %v1135 = vsel %vm1001, %v1077, 0.0
        %1136 = vadd.xlane.f32.xlu0 %v1135
        %v1137 = vpop.xlane.xlu0 %1136
        %v1138 = vsel %vm1001, %v1078, 0.0
        %1139 = vadd.xlane.f32.xlu0 %v1138
        %v1140 = vpop.xlane.xlu0 %1139
        %v1141 = vsel %vm1001, %v1079, 0.0
        %1142 = vadd.xlane.f32.xlu0 %v1141
        %v1143 = vpop.xlane.xlu0 %1142
        %v1144 = vsel %vm1001, %v1080, 0.0
        %1145 = vadd.xlane.f32.xlu0 %v1144
        %v1146 = vpop.xlane.xlu0 %1145
        %v1147 = vsel %vm1001, %v1081, 0.0
        %1148 = vadd.xlane.f32.xlu0 %v1147
        %v1149 = vpop.xlane.xlu0 %1148
        %v1150 = vsel %vm1001, %v1082, 0.0
        %1151 = vadd.xlane.f32.xlu0 %v1150
        %v1152 = vpop.xlane.xlu0 %1151
        %v1153 = vsel %vm1001, %v1083, 0.0
        %1154 = vadd.xlane.f32.xlu0 %v1153
        %v1155 = vpop.xlane.xlu0 %1154
        %v1156 = vsel %vm1001, %v1084, 0.0
        %1157 = vadd.xlane.f32.xlu0 %v1156
        %v1158 = vpop.xlane.xlu0 %1157
        %v1159 = vsel %vm1001, %v1085, 0.0
        %1160 = vadd.xlane.f32.xlu0 %v1159
        %v1161 = vpop.xlane.xlu0 %1160
        %v1162 = vsel %vm1001, %v1086, 0.0
        %1163 = vadd.xlane.f32.xlu0 %v1162
        %v1164 = vpop.xlane.xlu0 %1163
        %v1165 = vsel %vm1001, %v1087, 0.0
        %1166 = vadd.xlane.f32.xlu0 %v1165
        %v1167 = vpop.xlane.xlu0 %1166
        %v1168 = vsel %vm1001, %v1088, 0.0
        %1169 = vadd.xlane.f32.xlu0 %v1168
        %v1170 = vpop.xlane.xlu0 %1169
        %v1171 = vrcp.pop 32.0
        %v1172 = vmul.f32 32.0, %v1171
        %v1173 = vsub.f32 1.0, %v1172
        %v1174 = vmul.f32 %v1171, %v1173
        %v1175 = vadd.f32 %v1171, %v1174
        %vm1176 = vweird.f32 %v1171
        %v1177 = vsel %vm1176, %v1171, %v1175
        %v1178 = vmul.f32 %v1125, %v1177
        %v1179 = vmul.f32 %v1128, %v1177
        %v1180 = vmul.f32 %v1131, %v1177
        %v1181 = vmul.f32 %v1134, %v1177
        %v1182 = vmul.f32 %v1137, %v1177
        %v1183 = vmul.f32 %v1140, %v1177
        %v1184 = vmul.f32 %v1143, %v1177
        %v1185 = vmul.f32 %v1146, %v1177
        %v1186 = vmul.f32 %v1149, %v1177
        %v1187 = vmul.f32 %v1152, %v1177
        %v1188 = vmul.f32 %v1155, %v1177
        %v1189 = vmul.f32 %v1158, %v1177
        %v1190 = vmul.f32 %v1161, %v1177
        %v1191 = vmul.f32 %v1164, %v1177
        %v1192 = vmul.f32 %v1167, %v1177
        %v1193 = vmul.f32 %v1170, %v1177
        %v1194 = vsub.f32 %v1073, %v1178
        %v1195 = vsub.f32 %v1074, %v1179
        %v1196 = vsub.f32 %v1075, %v1180
        %v1197 = vsub.f32 %v1076, %v1181
        %v1198 = vsub.f32 %v1077, %v1182
        %v1199 = vsub.f32 %v1078, %v1183
        %v1200 = vsub.f32 %v1079, %v1184
        %v1201 = vsub.f32 %v1080, %v1185
        %v1202 = vsub.f32 %v1081, %v1186
        %v1203 = vsub.f32 %v1082, %v1187
        %v1204 = vsub.f32 %v1083, %v1188
        %v1205 = vsub.f32 %v1084, %v1189
        %v1206 = vsub.f32 %v1085, %v1190
        %v1207 = vsub.f32 %v1086, %v1191
        %v1208 = vsub.f32 %v1087, %v1192
        %v1209 = vsub.f32 %v1088, %v1193
        %v1210 = vmul.f32 %v1194, %v1194
        %v1211 = vmul.f32 %v1195, %v1195
        %v1212 = vmul.f32 %v1196, %v1196
        %v1213 = vmul.f32 %v1197, %v1197
        %v1214 = vmul.f32 %v1198, %v1198
        %v1215 = vmul.f32 %v1199, %v1199
        %v1216 = vmul.f32 %v1200, %v1200
        %v1217 = vmul.f32 %v1201, %v1201
        %v1218 = vmul.f32 %v1202, %v1202
        %v1219 = vmul.f32 %v1203, %v1203
        %v1220 = vmul.f32 %v1204, %v1204
        %v1221 = vmul.f32 %v1205, %v1205
        %v1222 = vmul.f32 %v1206, %v1206
        %v1223 = vmul.f32 %v1207, %v1207
        %v1224 = vmul.f32 %v1208, %v1208
        %v1225 = vmul.f32 %v1209, %v1209
        %v1226 = vsel %vm1001, %v1210, 0.0
        %1227 = vadd.xlane.f32.xlu0 %v1226
        %v1228 = vpop.xlane.xlu0 %1227
        %v1229 = vsel %vm1001, %v1211, 0.0
        %1230 = vadd.xlane.f32.xlu0 %v1229
        %v1231 = vpop.xlane.xlu0 %1230
        %v1232 = vsel %vm1001, %v1212, 0.0
        %1233 = vadd.xlane.f32.xlu0 %v1232
        %v1234 = vpop.xlane.xlu0 %1233
        %v1235 = vsel %vm1001, %v1213, 0.0
        %1236 = vadd.xlane.f32.xlu0 %v1235
        %v1237 = vpop.xlane.xlu0 %1236
        %v1238 = vsel %vm1001, %v1214, 0.0
        %1239 = vadd.xlane.f32.xlu0 %v1238
        %v1240 = vpop.xlane.xlu0 %1239
        %v1241 = vsel %vm1001, %v1215, 0.0
        %1242 = vadd.xlane.f32.xlu0 %v1241
        %v1243 = vpop.xlane.xlu0 %1242
        %v1244 = vsel %vm1001, %v1216, 0.0
        %1245 = vadd.xlane.f32.xlu0 %v1244
        %v1246 = vpop.xlane.xlu0 %1245
        %v1247 = vsel %vm1001, %v1217, 0.0
        %1248 = vadd.xlane.f32.xlu0 %v1247
        %v1249 = vpop.xlane.xlu0 %1248
        %v1250 = vsel %vm1001, %v1218, 0.0
        %1251 = vadd.xlane.f32.xlu0 %v1250
        %v1252 = vpop.xlane.xlu0 %1251
        %v1253 = vsel %vm1001, %v1219, 0.0
        %1254 = vadd.xlane.f32.xlu0 %v1253
        %v1255 = vpop.xlane.xlu0 %1254
        %v1256 = vsel %vm1001, %v1220, 0.0
        %1257 = vadd.xlane.f32.xlu0 %v1256
        %v1258 = vpop.xlane.xlu0 %1257
        %v1259 = vsel %vm1001, %v1221, 0.0
        %1260 = vadd.xlane.f32.xlu0 %v1259
        %v1261 = vpop.xlane.xlu0 %1260
        %v1262 = vsel %vm1001, %v1222, 0.0
        %1263 = vadd.xlane.f32.xlu0 %v1262
        %v1264 = vpop.xlane.xlu0 %1263
        %v1265 = vsel %vm1001, %v1223, 0.0
        %1266 = vadd.xlane.f32.xlu0 %v1265
        %v1267 = vpop.xlane.xlu0 %1266
        %v1268 = vsel %vm1001, %v1224, 0.0
        %1269 = vadd.xlane.f32.xlu0 %v1268
        %v1270 = vpop.xlane.xlu0 %1269
        %v1271 = vsel %vm1001, %v1225, 0.0
        %1272 = vadd.xlane.f32.xlu0 %v1271
        %v1273 = vpop.xlane.xlu0 %1272
        %v1274 = vmul.f32 %v1228, %v1177
        %v1275 = vmul.f32 %v1231, %v1177
        %v1276 = vmul.f32 %v1234, %v1177
        %v1277 = vmul.f32 %v1237, %v1177
        %v1278 = vmul.f32 %v1240, %v1177
        %v1279 = vmul.f32 %v1243, %v1177
        %v1280 = vmul.f32 %v1246, %v1177
        %v1281 = vmul.f32 %v1249, %v1177
        %v1282 = vmul.f32 %v1252, %v1177
        %v1283 = vmul.f32 %v1255, %v1177
        %v1284 = vmul.f32 %v1258, %v1177
        %v1285 = vmul.f32 %v1261, %v1177
        %v1286 = vmul.f32 %v1264, %v1177
        %v1287 = vmul.f32 %v1267, %v1177
        %v1288 = vmul.f32 %v1270, %v1177
        %v1289 = vmul.f32 %v1273, %v1177
        %v1290 = vadd.f32 %v1274, 1e-12
        %v1291 = vadd.f32 %v1275, 1e-12
        %v1292 = vadd.f32 %v1276, 1e-12
        %v1293 = vadd.f32 %v1277, 1e-12
        %v1294 = vadd.f32 %v1278, 1e-12
        %v1295 = vadd.f32 %v1279, 1e-12
        %v1296 = vadd.f32 %v1280, 1e-12
        %v1297 = vadd.f32 %v1281, 1e-12
        %v1298 = vadd.f32 %v1282, 1e-12
        %v1299 = vadd.f32 %v1283, 1e-12
        %v1300 = vadd.f32 %v1284, 1e-12
        %v1301 = vadd.f32 %v1285, 1e-12
        %v1302 = vadd.f32 %v1286, 1e-12
        %v1303 = vadd.f32 %v1287, 1e-12
        %v1304 = vadd.f32 %v1288, 1e-12
        %v1305 = vadd.f32 %v1289, 1e-12
        %v1306 = vrsqrt.pop %v1290
        %v1307 = vmul.f32 %v1306, %v1290
        %v1308 = vmul.f32 %v1307, %v1306
        %v1309 = vmul.f32 0.5, %v1308
        %v1310 = vsub.f32 1.5, %v1309
        %v1311 = vmul.f32 %v1306, %v1310
        %vm1312 = vweird.f32 %v1290
        %vm1313 = vweird.f32 %v1306
        %vm1314 = vmor %vm1312, %vm1313
        %v1315 = vsel %vm1314, %v1306, %v1311
        %v1316 = vrsqrt.pop %v1291
        %v1317 = vmul.f32 %v1316, %v1291
        %v1318 = vmul.f32 %v1317, %v1316
        %v1319 = vmul.f32 0.5, %v1318
        %v1320 = vsub.f32 1.5, %v1319
        %v1321 = vmul.f32 %v1316, %v1320
        %vm1322 = vweird.f32 %v1291
        %vm1323 = vweird.f32 %v1316
        %vm1324 = vmor %vm1322, %vm1323
        %v1325 = vsel %vm1324, %v1316, %v1321
        %v1326 = vrsqrt.pop %v1292
        %v1327 = vmul.f32 %v1326, %v1292
        %v1328 = vmul.f32 %v1327, %v1326
        %v1329 = vmul.f32 0.5, %v1328
        %v1330 = vsub.f32 1.5, %v1329
        %v1331 = vmul.f32 %v1326, %v1330
        %vm1332 = vweird.f32 %v1292
        %vm1333 = vweird.f32 %v1326
        %vm1334 = vmor %vm1332, %vm1333
        %v1335 = vsel %vm1334, %v1326, %v1331
        %v1336 = vrsqrt.pop %v1293
        %v1337 = vmul.f32 %v1336, %v1293
        %v1338 = vmul.f32 %v1337, %v1336
        %v1339 = vmul.f32 0.5, %v1338
        %v1340 = vsub.f32 1.5, %v1339
        %v1341 = vmul.f32 %v1336, %v1340
        %vm1342 = vweird.f32 %v1293
        %vm1343 = vweird.f32 %v1336
        %vm1344 = vmor %vm1342, %vm1343
        %v1345 = vsel %vm1344, %v1336, %v1341
        %v1346 = vrsqrt.pop %v1294
        %v1347 = vmul.f32 %v1346, %v1294
        %v1348 = vmul.f32 %v1347, %v1346
        %v1349 = vmul.f32 0.5, %v1348
        %v1350 = vsub.f32 1.5, %v1349
        %v1351 = vmul.f32 %v1346, %v1350
        %vm1352 = vweird.f32 %v1294
        %vm1353 = vweird.f32 %v1346
        %vm1354 = vmor %vm1352, %vm1353
        %v1355 = vsel %vm1354, %v1346, %v1351
        %v1356 = vrsqrt.pop %v1295
        %v1357 = vmul.f32 %v1356, %v1295
        %v1358 = vmul.f32 %v1357, %v1356
        %v1359 = vmul.f32 0.5, %v1358
        %v1360 = vsub.f32 1.5, %v1359
        %v1361 = vmul.f32 %v1356, %v1360
        %vm1362 = vweird.f32 %v1295
        %vm1363 = vweird.f32 %v1356
        %vm1364 = vmor %vm1362, %vm1363
        %v1365 = vsel %vm1364, %v1356, %v1361
        %v1366 = vrsqrt.pop %v1296
        %v1367 = vmul.f32 %v1366, %v1296
        %v1368 = vmul.f32 %v1367, %v1366
        %v1369 = vmul.f32 0.5, %v1368
        %v1370 = vsub.f32 1.5, %v1369
        %v1371 = vmul.f32 %v1366, %v1370
        %vm1372 = vweird.f32 %v1296
        %vm1373 = vweird.f32 %v1366
        %vm1374 = vmor %vm1372, %vm1373
        %v1375 = vsel %vm1374, %v1366, %v1371
        %v1376 = vrsqrt.pop %v1297
        %v1377 = vmul.f32 %v1376, %v1297
        %v1378 = vmul.f32 %v1377, %v1376
        %v1379 = vmul.f32 0.5, %v1378
        %v1380 = vsub.f32 1.5, %v1379
        %v1381 = vmul.f32 %v1376, %v1380
        %vm1382 = vweird.f32 %v1297
        %vm1383 = vweird.f32 %v1376
        %vm1384 = vmor %vm1382, %vm1383
        %v1385 = vsel %vm1384, %v1376, %v1381
        %v1386 = vrsqrt.pop %v1298
        %v1387 = vmul.f32 %v1386, %v1298
        %v1388 = vmul.f32 %v1387, %v1386
        %v1389 = vmul.f32 0.5, %v1388
        %v1390 = vsub.f32 1.5, %v1389
        %v1391 = vmul.f32 %v1386, %v1390
        %vm1392 = vweird.f32 %v1298
        %vm1393 = vweird.f32 %v1386
        %vm1394 = vmor %vm1392, %vm1393
        %v1395 = vsel %vm1394, %v1386, %v1391
        %v1396 = vrsqrt.pop %v1299
        %v1397 = vmul.f32 %v1396, %v1299
        %v1398 = vmul.f32 %v1397, %v1396
        %v1399 = vmul.f32 0.5, %v1398
        %v1400 = vsub.f32 1.5, %v1399
        %v1401 = vmul.f32 %v1396, %v1400
        %vm1402 = vweird.f32 %v1299
        %vm1403 = vweird.f32 %v1396
        %vm1404 = vmor %vm1402, %vm1403
        %v1405 = vsel %vm1404, %v1396, %v1401
        %v1406 = vrsqrt.pop %v1300
        %v1407 = vmul.f32 %v1406, %v1300
        %v1408 = vmul.f32 %v1407, %v1406
        %v1409 = vmul.f32 0.5, %v1408
        %v1410 = vsub.f32 1.5, %v1409
        %v1411 = vmul.f32 %v1406, %v1410
        %vm1412 = vweird.f32 %v1300
        %vm1413 = vweird.f32 %v1406
        %vm1414 = vmor %vm1412, %vm1413
        %v1415 = vsel %vm1414, %v1406, %v1411
        %v1416 = vrsqrt.pop %v1301
        %v1417 = vmul.f32 %v1416, %v1301
        %v1418 = vmul.f32 %v1417, %v1416
        %v1419 = vmul.f32 0.5, %v1418
        %v1420 = vsub.f32 1.5, %v1419
        %v1421 = vmul.f32 %v1416, %v1420
        %vm1422 = vweird.f32 %v1301
        %vm1423 = vweird.f32 %v1416
        %vm1424 = vmor %vm1422, %vm1423
        %v1425 = vsel %vm1424, %v1416, %v1421
        %v1426 = vrsqrt.pop %v1302
        %v1427 = vmul.f32 %v1426, %v1302
        %v1428 = vmul.f32 %v1427, %v1426
        %v1429 = vmul.f32 0.5, %v1428
        %v1430 = vsub.f32 1.5, %v1429
        %v1431 = vmul.f32 %v1426, %v1430
        %vm1432 = vweird.f32 %v1302
        %vm1433 = vweird.f32 %v1426
        %vm1434 = vmor %vm1432, %vm1433
        %v1435 = vsel %vm1434, %v1426, %v1431
        %v1436 = vrsqrt.pop %v1303
        %v1437 = vmul.f32 %v1436, %v1303
        %v1438 = vmul.f32 %v1437, %v1436
        %v1439 = vmul.f32 0.5, %v1438
        %v1440 = vsub.f32 1.5, %v1439
        %v1441 = vmul.f32 %v1436, %v1440
        %vm1442 = vweird.f32 %v1303
        %vm1443 = vweird.f32 %v1436
        %vm1444 = vmor %vm1442, %vm1443
        %v1445 = vsel %vm1444, %v1436, %v1441
        %v1446 = vrsqrt.pop %v1304
        %v1447 = vmul.f32 %v1446, %v1304
        %v1448 = vmul.f32 %v1447, %v1446
        %v1449 = vmul.f32 0.5, %v1448
        %v1450 = vsub.f32 1.5, %v1449
        %v1451 = vmul.f32 %v1446, %v1450
        %vm1452 = vweird.f32 %v1304
        %vm1453 = vweird.f32 %v1446
        %vm1454 = vmor %vm1452, %vm1453
        %v1455 = vsel %vm1454, %v1446, %v1451
        %v1456 = vrsqrt.pop %v1305
        %v1457 = vmul.f32 %v1456, %v1305
        %v1458 = vmul.f32 %v1457, %v1456
        %v1459 = vmul.f32 0.5, %v1458
        %v1460 = vsub.f32 1.5, %v1459
        %v1461 = vmul.f32 %v1456, %v1460
        %vm1462 = vweird.f32 %v1305
        %vm1463 = vweird.f32 %v1456
        %vm1464 = vmor %vm1462, %vm1463
        %v1465 = vsel %vm1464, %v1456, %v1461
        %v1466 = vmul.f32 %v1194, %v1315
        %v1467 = vmul.f32 %v1195, %v1325
        %v1468 = vmul.f32 %v1196, %v1335
        %v1469 = vmul.f32 %v1197, %v1345
        %v1470 = vmul.f32 %v1198, %v1355
        %v1471 = vmul.f32 %v1199, %v1365
        %v1472 = vmul.f32 %v1200, %v1375
        %v1473 = vmul.f32 %v1201, %v1385
        %v1474 = vmul.f32 %v1202, %v1395
        %v1475 = vmul.f32 %v1203, %v1405
        %v1476 = vmul.f32 %v1204, %v1415
        %v1477 = vmul.f32 %v1205, %v1425
        %v1478 = vmul.f32 %v1206, %v1435
        %v1479 = vmul.f32 %v1207, %v1445
        %v1480 = vmul.f32 %v1208, %v1455
        %v1481 = vmul.f32 %v1209, %v1465
        %v1483 = vperm.slane %v1121, 0
        %v1485 = vmul.f32 %v1483, %v1466
        %v1486 = vmul.f32 %v1483, %v1467
        %v1487 = vmul.f32 %v1483, %v1468
        %v1488 = vmul.f32 %v1483, %v1469
        %v1489 = vmul.f32 %v1483, %v1470
        %v1490 = vmul.f32 %v1483, %v1471
        %v1491 = vmul.f32 %v1483, %v1472
        %v1492 = vmul.f32 %v1483, %v1473
        %v1493 = vmul.f32 %v1483, %v1474
        %v1494 = vmul.f32 %v1483, %v1475
        %v1495 = vmul.f32 %v1483, %v1476
        %v1496 = vmul.f32 %v1483, %v1477
        %v1497 = vmul.f32 %v1483, %v1478
        %v1498 = vmul.f32 %v1483, %v1479
        %v1499 = vmul.f32 %v1483, %v1480
        %v1500 = vmul.f32 %v1483, %v1481
        %v1502 = vperm.slane %v1122, 0
        %v1504 = vadd.f32 %v1485, %v1502
        %v1505 = vadd.f32 %v1486, %v1502
        %v1506 = vadd.f32 %v1487, %v1502
        %v1507 = vadd.f32 %v1488, %v1502
        %v1508 = vadd.f32 %v1489, %v1502
        %v1509 = vadd.f32 %v1490, %v1502
        %v1510 = vadd.f32 %v1491, %v1502
        %v1511 = vadd.f32 %v1492, %v1502
        %v1512 = vadd.f32 %v1493, %v1502
        %v1513 = vadd.f32 %v1494, %v1502
        %v1514 = vadd.f32 %v1495, %v1502
        %v1515 = vadd.f32 %v1496, %v1502
        %v1516 = vadd.f32 %v1497, %v1502
        %v1517 = vadd.f32 %v1498, %v1502
        %v1518 = vadd.f32 %v1499, %v1502
        %v1519 = vadd.f32 %v1500, %v1502
        %1520 = vst.msk [vmem:[%s600] sm:$0xff] %vm1001, %v1504
        %1521 = vst.msk [vmem:[%s600 + $0x8] sm:$0xff] %vm1001, %v1505
        %1522 = vst.msk [vmem:[%s600 + $0x10] sm:$0xff] %vm1001, %v1506
        %1523 = vst.msk [vmem:[%s600 + $0x18] sm:$0xff] %vm1001, %v1507
        %1524 = vst.msk [vmem:[%s600 + $0x20] sm:$0xff] %vm1001, %v1508
        %1525 = vst.msk [vmem:[%s600 + $0x28] sm:$0xff] %vm1001, %v1509
        %1526 = vst.msk [vmem:[%s600 + $0x30] sm:$0xff] %vm1001, %v1510
        %1527 = vst.msk [vmem:[%s600 + $0x38] sm:$0xff] %vm1001, %v1511
        %1528 = vst.msk [vmem:[%s600 + $0x40] sm:$0xff] %vm1001, %v1512
        %1529 = vst.msk [vmem:[%s600 + $0x48] sm:$0xff] %vm1001, %v1513
        %1530 = vst.msk [vmem:[%s600 + $0x50] sm:$0xff] %vm1001, %v1514
        %1531 = vst.msk [vmem:[%s600 + $0x58] sm:$0xff] %vm1001, %v1515
        %1532 = vst.msk [vmem:[%s600 + $0x60] sm:$0xff] %vm1001, %v1516
        %1533 = vst.msk [vmem:[%s600 + $0x68] sm:$0xff] %vm1001, %v1517
        %1534 = vst.msk [vmem:[%s600 + $0x70] sm:$0xff] %vm1001, %v1518
        %1535 = vst.msk [vmem:[%s600 + $0x78] sm:$0xff] %vm1001, %v1519
        %v1536 = vld [vmem:[%s9] sm:$0x1]
        %v1537 = vld [vmem:[%s10] sm:$0x1]
        %v1538 = vsel %vm1001, %v1105, 0.0
        %1539 = vadd.xlane.f32.xlu0 %v1538
        %v1540 = vpop.xlane.xlu0 %1539
        %v1541 = vsel %vm1001, %v1106, 0.0
        %1542 = vadd.xlane.f32.xlu0 %v1541
        %v1543 = vpop.xlane.xlu0 %1542
        %v1544 = vsel %vm1001, %v1107, 0.0
        %1545 = vadd.xlane.f32.xlu0 %v1544
        %v1546 = vpop.xlane.xlu0 %1545
        %v1547 = vsel %vm1001, %v1108, 0.0
        %1548 = vadd.xlane.f32.xlu0 %v1547
        %v1549 = vpop.xlane.xlu0 %1548
        %v1550 = vsel %vm1001, %v1109, 0.0
        %1551 = vadd.xlane.f32.xlu0 %v1550
        %v1552 = vpop.xlane.xlu0 %1551
        %v1553 = vsel %vm1001, %v1110, 0.0
        %1554 = vadd.xlane.f32.xlu0 %v1553
        %v1555 = vpop.xlane.xlu0 %1554
        %v1556 = vsel %vm1001, %v1111, 0.0
        %1557 = vadd.xlane.f32.xlu0 %v1556
        %v1558 = vpop.xlane.xlu0 %1557
        %v1559 = vsel %vm1001, %v1112, 0.0
        %1560 = vadd.xlane.f32.xlu0 %v1559
        %v1561 = vpop.xlane.xlu0 %1560
        %v1562 = vsel %vm1001, %v1113, 0.0
        %1563 = vadd.xlane.f32.xlu0 %v1562
        %v1564 = vpop.xlane.xlu0 %1563
        %v1565 = vsel %vm1001, %v1114, 0.0
        %1566 = vadd.xlane.f32.xlu0 %v1565
        %v1567 = vpop.xlane.xlu0 %1566
        %v1568 = vsel %vm1001, %v1115, 0.0
        %1569 = vadd.xlane.f32.xlu0 %v1568
        %v1570 = vpop.xlane.xlu0 %1569
        %v1571 = vsel %vm1001, %v1116, 0.0
        %1572 = vadd.xlane.f32.xlu0 %v1571
        %v1573 = vpop.xlane.xlu0 %1572
        %v1574 = vsel %vm1001, %v1117, 0.0
        %1575 = vadd.xlane.f32.xlu0 %v1574
        %v1576 = vpop.xlane.xlu0 %1575
        %v1577 = vsel %vm1001, %v1118, 0.0
        %1578 = vadd.xlane.f32.xlu0 %v1577
        %v1579 = vpop.xlane.xlu0 %1578
        %v1580 = vsel %vm1001, %v1119, 0.0
        %1581 = vadd.xlane.f32.xlu0 %v1580
        %v1582 = vpop.xlane.xlu0 %1581
        %v1583 = vsel %vm1001, %v1120, 0.0
        %1584 = vadd.xlane.f32.xlu0 %v1583
        %v1585 = vpop.xlane.xlu0 %1584
        %v1586 = vmul.f32 %v1540, %v1177
        %v1587 = vmul.f32 %v1543, %v1177
        %v1588 = vmul.f32 %v1546, %v1177
        %v1589 = vmul.f32 %v1549, %v1177
        %v1590 = vmul.f32 %v1552, %v1177
        %v1591 = vmul.f32 %v1555, %v1177
        %v1592 = vmul.f32 %v1558, %v1177
        %v1593 = vmul.f32 %v1561, %v1177
        %v1594 = vmul.f32 %v1564, %v1177
        %v1595 = vmul.f32 %v1567, %v1177
        %v1596 = vmul.f32 %v1570, %v1177
        %v1597 = vmul.f32 %v1573, %v1177
        %v1598 = vmul.f32 %v1576, %v1177
        %v1599 = vmul.f32 %v1579, %v1177
        %v1600 = vmul.f32 %v1582, %v1177
        %v1601 = vmul.f32 %v1585, %v1177
        %v1602 = vsub.f32 %v1105, %v1586
        %v1603 = vsub.f32 %v1106, %v1587
        %v1604 = vsub.f32 %v1107, %v1588
        %v1605 = vsub.f32 %v1108, %v1589
        %v1606 = vsub.f32 %v1109, %v1590
        %v1607 = vsub.f32 %v1110, %v1591
        %v1608 = vsub.f32 %v1111, %v1592
        %v1609 = vsub.f32 %v1112, %v1593
        %v1610 = vsub.f32 %v1113, %v1594
        %v1611 = vsub.f32 %v1114, %v1595
        %v1612 = vsub.f32 %v1115, %v1596
        %v1613 = vsub.f32 %v1116, %v1597
        %v1614 = vsub.f32 %v1117, %v1598
        %v1615 = vsub.f32 %v1118, %v1599
        %v1616 = vsub.f32 %v1119, %v1600
        %v1617 = vsub.f32 %v1120, %v1601
        %v1618 = vmul.f32 %v1602, %v1602
        %v1619 = vmul.f32 %v1603, %v1603
        %v1620 = vmul.f32 %v1604, %v1604
        %v1621 = vmul.f32 %v1605, %v1605
        %v1622 = vmul.f32 %v1606, %v1606
        %v1623 = vmul.f32 %v1607, %v1607
        %v1624 = vmul.f32 %v1608, %v1608
        %v1625 = vmul.f32 %v1609, %v1609
        %v1626 = vmul.f32 %v1610, %v1610
        %v1627 = vmul.f32 %v1611, %v1611
        %v1628 = vmul.f32 %v1612, %v1612
        %v1629 = vmul.f32 %v1613, %v1613
        %v1630 = vmul.f32 %v1614, %v1614
        %v1631 = vmul.f32 %v1615, %v1615
        %v1632 = vmul.f32 %v1616, %v1616
        %v1633 = vmul.f32 %v1617, %v1617
        %v1634 = vsel %vm1001, %v1618, 0.0
        %1635 = vadd.xlane.f32.xlu0 %v1634
        %v1636 = vpop.xlane.xlu0 %1635
        %v1637 = vsel %vm1001, %v1619, 0.0
        %1638 = vadd.xlane.f32.xlu0 %v1637
        %v1639 = vpop.xlane.xlu0 %1638
        %v1640 = vsel %vm1001, %v1620, 0.0
        %1641 = vadd.xlane.f32.xlu0 %v1640
        %v1642 = vpop.xlane.xlu0 %1641
        %v1643 = vsel %vm1001, %v1621, 0.0
        %1644 = vadd.xlane.f32.xlu0 %v1643
        %v1645 = vpop.xlane.xlu0 %1644
        %v1646 = vsel %vm1001, %v1622, 0.0
        %1647 = vadd.xlane.f32.xlu0 %v1646
        %v1648 = vpop.xlane.xlu0 %1647
        %v1649 = vsel %vm1001, %v1623, 0.0
        %1650 = vadd.xlane.f32.xlu0 %v1649
        %v1651 = vpop.xlane.xlu0 %1650
        %v1652 = vsel %vm1001, %v1624, 0.0
        %1653 = vadd.xlane.f32.xlu0 %v1652
        %v1654 = vpop.xlane.xlu0 %1653
        %v1655 = vsel %vm1001, %v1625, 0.0
        %1656 = vadd.xlane.f32.xlu0 %v1655
        %v1657 = vpop.xlane.xlu0 %1656
        %v1658 = vsel %vm1001, %v1626, 0.0
        %1659 = vadd.xlane.f32.xlu0 %v1658
        %v1660 = vpop.xlane.xlu0 %1659
        %v1661 = vsel %vm1001, %v1627, 0.0
        %1662 = vadd.xlane.f32.xlu0 %v1661
        %v1663 = vpop.xlane.xlu0 %1662
        %v1664 = vsel %vm1001, %v1628, 0.0
        %1665 = vadd.xlane.f32.xlu0 %v1664
        %v1666 = vpop.xlane.xlu0 %1665
        %v1667 = vsel %vm1001, %v1629, 0.0
        %1668 = vadd.xlane.f32.xlu0 %v1667
        %v1669 = vpop.xlane.xlu0 %1668
        %v1670 = vsel %vm1001, %v1630, 0.0
        %1671 = vadd.xlane.f32.xlu0 %v1670
        %v1672 = vpop.xlane.xlu0 %1671
        %v1673 = vsel %vm1001, %v1631, 0.0
        %1674 = vadd.xlane.f32.xlu0 %v1673
        %v1675 = vpop.xlane.xlu0 %1674
        %v1676 = vsel %vm1001, %v1632, 0.0
        %1677 = vadd.xlane.f32.xlu0 %v1676
        %v1678 = vpop.xlane.xlu0 %1677
        %v1679 = vsel %vm1001, %v1633, 0.0
        %1680 = vadd.xlane.f32.xlu0 %v1679
        %v1681 = vpop.xlane.xlu0 %1680
        %v1682 = vmul.f32 %v1636, %v1177
        %v1683 = vmul.f32 %v1639, %v1177
        %v1684 = vmul.f32 %v1642, %v1177
        %v1685 = vmul.f32 %v1645, %v1177
        %v1686 = vmul.f32 %v1648, %v1177
        %v1687 = vmul.f32 %v1651, %v1177
        %v1688 = vmul.f32 %v1654, %v1177
        %v1689 = vmul.f32 %v1657, %v1177
        %v1690 = vmul.f32 %v1660, %v1177
        %v1691 = vmul.f32 %v1663, %v1177
        %v1692 = vmul.f32 %v1666, %v1177
        %v1693 = vmul.f32 %v1669, %v1177
        %v1694 = vmul.f32 %v1672, %v1177
        %v1695 = vmul.f32 %v1675, %v1177
        %v1696 = vmul.f32 %v1678, %v1177
        %v1697 = vmul.f32 %v1681, %v1177
        %v1698 = vadd.f32 %v1682, 1e-12
        %v1699 = vadd.f32 %v1683, 1e-12
        %v1700 = vadd.f32 %v1684, 1e-12
        %v1701 = vadd.f32 %v1685, 1e-12
        %v1702 = vadd.f32 %v1686, 1e-12
        %v1703 = vadd.f32 %v1687, 1e-12
        %v1704 = vadd.f32 %v1688, 1e-12
        %v1705 = vadd.f32 %v1689, 1e-12
        %v1706 = vadd.f32 %v1690, 1e-12
        %v1707 = vadd.f32 %v1691, 1e-12
        %v1708 = vadd.f32 %v1692, 1e-12
        %v1709 = vadd.f32 %v1693, 1e-12
        %v1710 = vadd.f32 %v1694, 1e-12
        %v1711 = vadd.f32 %v1695, 1e-12
        %v1712 = vadd.f32 %v1696, 1e-12
        %v1713 = vadd.f32 %v1697, 1e-12
        %v1714 = vrsqrt.pop %v1698
        %v1715 = vmul.f32 %v1714, %v1698
        %v1716 = vmul.f32 %v1715, %v1714
        %v1717 = vmul.f32 0.5, %v1716
        %v1718 = vsub.f32 1.5, %v1717
        %v1719 = vmul.f32 %v1714, %v1718
        %vm1720 = vweird.f32 %v1698
        %vm1721 = vweird.f32 %v1714
        %vm1722 = vmor %vm1720, %vm1721
        %v1723 = vsel %vm1722, %v1714, %v1719
        %v1724 = vrsqrt.pop %v1699
        %v1725 = vmul.f32 %v1724, %v1699
        %v1726 = vmul.f32 %v1725, %v1724
        %v1727 = vmul.f32 0.5, %v1726
        %v1728 = vsub.f32 1.5, %v1727
        %v1729 = vmul.f32 %v1724, %v1728
        %vm1730 = vweird.f32 %v1699
        %vm1731 = vweird.f32 %v1724
        %vm1732 = vmor %vm1730, %vm1731
        %v1733 = vsel %vm1732, %v1724, %v1729
        %v1734 = vrsqrt.pop %v1700
        %v1735 = vmul.f32 %v1734, %v1700
        %v1736 = vmul.f32 %v1735, %v1734
        %v1737 = vmul.f32 0.5, %v1736
        %v1738 = vsub.f32 1.5, %v1737
        %v1739 = vmul.f32 %v1734, %v1738
        %vm1740 = vweird.f32 %v1700
        %vm1741 = vweird.f32 %v1734
        %vm1742 = vmor %vm1740, %vm1741
        %v1743 = vsel %vm1742, %v1734, %v1739
        %v1744 = vrsqrt.pop %v1701
        %v1745 = vmul.f32 %v1744, %v1701
        %v1746 = vmul.f32 %v1745, %v1744
        %v1747 = vmul.f32 0.5, %v1746
        %v1748 = vsub.f32 1.5, %v1747
        %v1749 = vmul.f32 %v1744, %v1748
        %vm1750 = vweird.f32 %v1701
        %vm1751 = vweird.f32 %v1744
        %vm1752 = vmor %vm1750, %vm1751
        %v1753 = vsel %vm1752, %v1744, %v1749
        %v1754 = vrsqrt.pop %v1702
        %v1755 = vmul.f32 %v1754, %v1702
        %v1756 = vmul.f32 %v1755, %v1754
        %v1757 = vmul.f32 0.5, %v1756
        %v1758 = vsub.f32 1.5, %v1757
        %v1759 = vmul.f32 %v1754, %v1758
        %vm1760 = vweird.f32 %v1702
        %vm1761 = vweird.f32 %v1754
        %vm1762 = vmor %vm1760, %vm1761
        %v1763 = vsel %vm1762, %v1754, %v1759
        %v1764 = vrsqrt.pop %v1703
        %v1765 = vmul.f32 %v1764, %v1703
        %v1766 = vmul.f32 %v1765, %v1764
        %v1767 = vmul.f32 0.5, %v1766
        %v1768 = vsub.f32 1.5, %v1767
        %v1769 = vmul.f32 %v1764, %v1768
        %vm1770 = vweird.f32 %v1703
        %vm1771 = vweird.f32 %v1764
        %vm1772 = vmor %vm1770, %vm1771
        %v1773 = vsel %vm1772, %v1764, %v1769
        %v1774 = vrsqrt.pop %v1704
        %v1775 = vmul.f32 %v1774, %v1704
        %v1776 = vmul.f32 %v1775, %v1774
        %v1777 = vmul.f32 0.5, %v1776
        %v1778 = vsub.f32 1.5, %v1777
        %v1779 = vmul.f32 %v1774, %v1778
        %vm1780 = vweird.f32 %v1704
        %vm1781 = vweird.f32 %v1774
        %vm1782 = vmor %vm1780, %vm1781
        %v1783 = vsel %vm1782, %v1774, %v1779
        %v1784 = vrsqrt.pop %v1705
        %v1785 = vmul.f32 %v1784, %v1705
        %v1786 = vmul.f32 %v1785, %v1784
        %v1787 = vmul.f32 0.5, %v1786
        %v1788 = vsub.f32 1.5, %v1787
        %v1789 = vmul.f32 %v1784, %v1788
        %vm1790 = vweird.f32 %v1705
        %vm1791 = vweird.f32 %v1784
        %vm1792 = vmor %vm1790, %vm1791
        %v1793 = vsel %vm1792, %v1784, %v1789
        %v1794 = vrsqrt.pop %v1706
        %v1795 = vmul.f32 %v1794, %v1706
        %v1796 = vmul.f32 %v1795, %v1794
        %v1797 = vmul.f32 0.5, %v1796
        %v1798 = vsub.f32 1.5, %v1797
        %v1799 = vmul.f32 %v1794, %v1798
        %vm1800 = vweird.f32 %v1706
        %vm1801 = vweird.f32 %v1794
        %vm1802 = vmor %vm1800, %vm1801
        %v1803 = vsel %vm1802, %v1794, %v1799
        %v1804 = vrsqrt.pop %v1707
        %v1805 = vmul.f32 %v1804, %v1707
        %v1806 = vmul.f32 %v1805, %v1804
        %v1807 = vmul.f32 0.5, %v1806
        %v1808 = vsub.f32 1.5, %v1807
        %v1809 = vmul.f32 %v1804, %v1808
        %vm1810 = vweird.f32 %v1707
        %vm1811 = vweird.f32 %v1804
        %vm1812 = vmor %vm1810, %vm1811
        %v1813 = vsel %vm1812, %v1804, %v1809
        %v1814 = vrsqrt.pop %v1708
        %v1815 = vmul.f32 %v1814, %v1708
        %v1816 = vmul.f32 %v1815, %v1814
        %v1817 = vmul.f32 0.5, %v1816
        %v1818 = vsub.f32 1.5, %v1817
        %v1819 = vmul.f32 %v1814, %v1818
        %vm1820 = vweird.f32 %v1708
        %vm1821 = vweird.f32 %v1814
        %vm1822 = vmor %vm1820, %vm1821
        %v1823 = vsel %vm1822, %v1814, %v1819
        %v1824 = vrsqrt.pop %v1709
        %v1825 = vmul.f32 %v1824, %v1709
        %v1826 = vmul.f32 %v1825, %v1824
        %v1827 = vmul.f32 0.5, %v1826
        %v1828 = vsub.f32 1.5, %v1827
        %v1829 = vmul.f32 %v1824, %v1828
        %vm1830 = vweird.f32 %v1709
        %vm1831 = vweird.f32 %v1824
        %vm1832 = vmor %vm1830, %vm1831
        %v1833 = vsel %vm1832, %v1824, %v1829
        %v1834 = vrsqrt.pop %v1710
        %v1835 = vmul.f32 %v1834, %v1710
        %v1836 = vmul.f32 %v1835, %v1834
        %v1837 = vmul.f32 0.5, %v1836
        %v1838 = vsub.f32 1.5, %v1837
        %v1839 = vmul.f32 %v1834, %v1838
        %vm1840 = vweird.f32 %v1710
        %vm1841 = vweird.f32 %v1834
        %vm1842 = vmor %vm1840, %vm1841
        %v1843 = vsel %vm1842, %v1834, %v1839
        %v1844 = vrsqrt.pop %v1711
        %v1845 = vmul.f32 %v1844, %v1711
        %v1846 = vmul.f32 %v1845, %v1844
        %v1847 = vmul.f32 0.5, %v1846
        %v1848 = vsub.f32 1.5, %v1847
        %v1849 = vmul.f32 %v1844, %v1848
        %vm1850 = vweird.f32 %v1711
        %vm1851 = vweird.f32 %v1844
        %vm1852 = vmor %vm1850, %vm1851
        %v1853 = vsel %vm1852, %v1844, %v1849
        %v1854 = vrsqrt.pop %v1712
        %v1855 = vmul.f32 %v1854, %v1712
        %v1856 = vmul.f32 %v1855, %v1854
        %v1857 = vmul.f32 0.5, %v1856
        %v1858 = vsub.f32 1.5, %v1857
        %v1859 = vmul.f32 %v1854, %v1858
        %vm1860 = vweird.f32 %v1712
        %vm1861 = vweird.f32 %v1854
        %vm1862 = vmor %vm1860, %vm1861
        %v1863 = vsel %vm1862, %v1854, %v1859
        %v1864 = vrsqrt.pop %v1713
        %v1865 = vmul.f32 %v1864, %v1713
        %v1866 = vmul.f32 %v1865, %v1864
        %v1867 = vmul.f32 0.5, %v1866
        %v1868 = vsub.f32 1.5, %v1867
        %v1869 = vmul.f32 %v1864, %v1868
        %vm1870 = vweird.f32 %v1713
        %vm1871 = vweird.f32 %v1864
        %vm1872 = vmor %vm1870, %vm1871
        %v1873 = vsel %vm1872, %v1864, %v1869
        %v1874 = vmul.f32 %v1602, %v1723
        %v1875 = vmul.f32 %v1603, %v1733
        %v1876 = vmul.f32 %v1604, %v1743
        %v1877 = vmul.f32 %v1605, %v1753
        %v1878 = vmul.f32 %v1606, %v1763
        %v1879 = vmul.f32 %v1607, %v1773
        %v1880 = vmul.f32 %v1608, %v1783
        %v1881 = vmul.f32 %v1609, %v1793
        %v1882 = vmul.f32 %v1610, %v1803
        %v1883 = vmul.f32 %v1611, %v1813
        %v1884 = vmul.f32 %v1612, %v1823
        %v1885 = vmul.f32 %v1613, %v1833
        %v1886 = vmul.f32 %v1614, %v1843
        %v1887 = vmul.f32 %v1615, %v1853
        %v1888 = vmul.f32 %v1616, %v1863
        %v1889 = vmul.f32 %v1617, %v1873
        %v1891 = vperm.slane %v1536, 0
        %v1893 = vmul.f32 %v1891, %v1874
        %v1894 = vmul.f32 %v1891, %v1875
        %v1895 = vmul.f32 %v1891, %v1876
        %v1896 = vmul.f32 %v1891, %v1877
        %v1897 = vmul.f32 %v1891, %v1878
        %v1898 = vmul.f32 %v1891, %v1879
        %v1899 = vmul.f32 %v1891, %v1880
        %v1900 = vmul.f32 %v1891, %v1881
        %v1901 = vmul.f32 %v1891, %v1882
        %v1902 = vmul.f32 %v1891, %v1883
        %v1903 = vmul.f32 %v1891, %v1884
        %v1904 = vmul.f32 %v1891, %v1885
        %v1905 = vmul.f32 %v1891, %v1886
        %v1906 = vmul.f32 %v1891, %v1887
        %v1907 = vmul.f32 %v1891, %v1888
        %v1908 = vmul.f32 %v1891, %v1889
        %v1910 = vperm.slane %v1537, 0
        %v1912 = vadd.f32 %v1893, %v1910
        %v1913 = vadd.f32 %v1894, %v1910
        %v1914 = vadd.f32 %v1895, %v1910
        %v1915 = vadd.f32 %v1896, %v1910
        %v1916 = vadd.f32 %v1897, %v1910
        %v1917 = vadd.f32 %v1898, %v1910
        %v1918 = vadd.f32 %v1899, %v1910
        %v1919 = vadd.f32 %v1900, %v1910
        %v1920 = vadd.f32 %v1901, %v1910
        %v1921 = vadd.f32 %v1902, %v1910
        %v1922 = vadd.f32 %v1903, %v1910
        %v1923 = vadd.f32 %v1904, %v1910
        %v1924 = vadd.f32 %v1905, %v1910
        %v1925 = vadd.f32 %v1906, %v1910
        %v1926 = vadd.f32 %v1907, %v1910
        %v1927 = vadd.f32 %v1908, %v1910
        %1928 = vst.msk [vmem:[%s610] sm:$0xff] %vm1001, %v1912
        %1929 = vst.msk [vmem:[%s610 + $0x8] sm:$0xff] %vm1001, %v1913
        %1930 = vst.msk [vmem:[%s610 + $0x10] sm:$0xff] %vm1001, %v1914
        %1931 = vst.msk [vmem:[%s610 + $0x18] sm:$0xff] %vm1001, %v1915
        %1932 = vst.msk [vmem:[%s610 + $0x20] sm:$0xff] %vm1001, %v1916
        %1933 = vst.msk [vmem:[%s610 + $0x28] sm:$0xff] %vm1001, %v1917
        %1934 = vst.msk [vmem:[%s610 + $0x30] sm:$0xff] %vm1001, %v1918
        %1935 = vst.msk [vmem:[%s610 + $0x38] sm:$0xff] %vm1001, %v1919
        %1936 = vst.msk [vmem:[%s610 + $0x40] sm:$0xff] %vm1001, %v1920
        %1937 = vst.msk [vmem:[%s610 + $0x48] sm:$0xff] %vm1001, %v1921
        %1938 = vst.msk [vmem:[%s610 + $0x50] sm:$0xff] %vm1001, %v1922
        %1939 = vst.msk [vmem:[%s610 + $0x58] sm:$0xff] %vm1001, %v1923
        %1940 = vst.msk [vmem:[%s610 + $0x60] sm:$0xff] %vm1001, %v1924
        %1941 = vst.msk [vmem:[%s610 + $0x68] sm:$0xff] %vm1001, %v1925
        %1942 = vst.msk [vmem:[%s610 + $0x70] sm:$0xff] %vm1001, %v1926
        %1943 = vst.msk [vmem:[%s610 + $0x78] sm:$0xff] %vm1001, %v1927
      $region72: #{intermediate_i_s_forward.1} parent=63 // pred_fallthru
        _
      %s1944 = smul.u32 16, %s30
      %p1945 = scmp.lt.s32.totalorder %s29, 1
      %s1946 = scalar_select %p1945, %s29, 1
      %p1947 = scmp.lt.s32.totalorder %s1944, 15
      %s1948 = scalar_select %p1947, %s1944, 15
      %s1949 = smul.addr %s1946, 16
      %s1950 = sadd.s32 %s1948, %s1949
      %s1951 = smul.addr %s1950, 8
      %s1952 = scalar_lea.vmem %s11, %s1951
      %s1953 = smul.u32 16, %s30
      %p1954 = scmp.lt.s32.totalorder %s29, 1
      %s1955 = scalar_select %p1954, %s29, 1
      %p1956 = scmp.lt.s32.totalorder %s1953, 15
      %s1957 = scalar_select %p1956, %s1953, 15
      %s1958 = smul.addr %s1955, 16
      %s1959 = sadd.s32 %s1957, %s1958
      %s1960 = smul.addr %s1959, 8
      %s1961 = scalar_lea.vmem %s12, %s1960
      // Predicated region
      $region73: #{intermediate_i_s_forward.1} parent=63 // pred_check
        %p1962 = pneg %p330
      $region74: #{intermediate_i_s_forward.1} parent=63 // pred_check_branch
        %1964 = sbr.rel (%p1962) target = $region76
      $region75: #{intermediate_i_s_forward.1} parent=63 // pred_region
        %s1965 = smul.u32 16, %s30
      $region76: #{intermediate_i_s_forward.1} parent=63 // pred_fallthru
        _
      // Predicated region
      $region77: #{intermediate_i_s_forward.1} parent=63 // pred_check
        %p1966 = pneg %p358
      $region78: #{intermediate_i_s_forward.1} parent=63 // pred_check_branch
        %1968 = sbr.rel (%p1966) target = $region80
      $region79: #{intermediate_i_s_forward.1} parent=63 // pred_region
        %s1969 = smul.u32 16, %s30
      $region80: #{intermediate_i_s_forward.1} parent=63 // pred_fallthru
        _
    $region64: #{intermediate_i_s_forward.1} parent=5 // pred_fallthru
      _
    %p1970 = scmp.le.s32.totalorder 2, %s19
    // Predicated region
    $region81: #{intermediate_i_s_forward.1} parent=5 // pred_check
      %p1971 = pneg %p1970
    $region82: #{intermediate_i_s_forward.1} parent=5 // pred_check_branch
      %1973 = sbr.rel (%p1971) target = $region84
    $region83: #{intermediate_i_s_forward.1} parent=5 // pred_region
      %s1974 = ssub.s32 %s19, 2
      // Predicated region
      $region85: #{intermediate_i_s_forward.1} parent=83 // pred_check
        %p1975 = pneg %p336
      $region86: #{intermediate_i_s_forward.1} parent=83 // pred_check_branch
        %1977 = sbr.rel (%p1975) target = $region88
      $region87: #{intermediate_i_s_forward.1} parent=83 // pred_region
        %s1978 = smul.u32 16, %s33
        %p1979 = scmp.lt.s32.totalorder %s32, 1
        %s1980 = scalar_select %p1979, %s32, 1
        %p1981 = scmp.lt.s32.totalorder %s1978, 15
        %s1982 = scalar_select %p1981, %s1978, 15
        %s1983 = smul.addr %s1980, 16
        %s1984 = sadd.s32 %s1982, %s1983
        %s1985 = smul.addr %s1984, 8
        %s1986 = scalar_lea.vmem %s11, %s1985
      $region88: #{intermediate_i_s_forward.1} parent=83 // pred_fallthru
        _
      // Predicated region
      $region89: #{intermediate_i_s_forward.1} parent=83 // pred_check
        %p1987 = pneg %p364
      $region90: #{intermediate_i_s_forward.1} parent=83 // pred_check_branch
        %1989 = sbr.rel (%p1987) target = $region92
      $region91: #{intermediate_i_s_forward.1} parent=83 // pred_region
        %s1990 = smul.u32 16, %s33
        %p1991 = scmp.lt.s32.totalorder %s32, 1
        %s1992 = scalar_select %p1991, %s32, 1
        %p1993 = scmp.lt.s32.totalorder %s1990, 15
        %s1994 = scalar_select %p1993, %s1990, 15
        %s1995 = smul.addr %s1992, 16
        %s1996 = sadd.s32 %s1994, %s1995
        %s1997 = smul.addr %s1996, 8
        %s1998 = scalar_lea.vmem %s12, %s1997
      $region92: #{intermediate_i_s_forward.1} parent=83 // pred_fallthru
        _
    $region84: #{intermediate_i_s_forward.1} parent=5 // pred_fallthru
      _
  $region6: #{intermediate_i_s_forward.1} parent=0 // loop_footer
    %s23 = sadd.s32 1, %s19
  $region7: #{intermediate_i_s_forward.1} parent=0 // loop_footer_branch
    %18 = sbr.rel target = $region3
  $region8: #{intermediate_i_s_forward.1} parent=0 // loop_exit
    _

</llo_original>
